<compile_context>
chip_gen: v7x
topology: tpu7x:2x2x1
jax: 0.10.0
libtpu: 0.0.40
codegen_flags: <defaults>
</compile_context>

<pallas_src>
import jax
import jax.numpy as jnp
from jax.experimental import pallas as pl
from jax.experimental.pallas import tpu as pltpu

# ---------------- problem sizes (small, consistent with the module) ----------
B = 2            # batch
T = 8            # sequence length of `signal`
D = 4            # signal feature dim
H = 32           # LSTM hidden size (ht dim)
A = 2            # SAC action dim: [steering, throttle]
G4 = 4 * H       # 128 : packed LSTM gate width (torch order i | f | g | o)
NL = 128         # lane-dense width for packed slabs / output
DT = 0.1
LOGSTD_MIN, LOGSTD_MAX = -20.0, 2.0

# ---- bf16 weight slab row layout (blocks aligned to 16-row bf16 tiles) ------
W_HH_ROW = 0                    # (H, 4H)
W_IH_ROW = W_HH_ROW + H         # (D, 4H)  rows 32:36
W_HEAD_ROW = 48                 # (H, NL)  cols: res1(0:H)|mean|logstd|value|done
W_RES2_ROW = W_HEAD_ROW + H     # (H, NL)  cols 0:2
W_ROWS = W_RES2_ROW + H         # 112

# fused head-slab column layout
RES1_OFF = 0
MEAN_OFF = H
LOGSTD_OFF = H + A
VALUE_OFF = H + 2 * A
DONE_OFF = H + 2 * A + 1

# ---- f32 aux slab row layout (blocks aligned to 8-row f32 tiles) ------------
AUX_BLSTM_ROW = 0               # (1, 4H)  b_ih + b_hh
AUX_BHEAD_ROW = 1               # (1, NL)
AUX_BRES2_ROW = 2               # (1, NL)  cols 0:2
AUX_MISC_ROW = 8                # (B, NL): noise(0:A)|cur_x|cur_y|cur_angle
AUX_SIG_ROW = 16                # (T*B, NL): time-major signal, cols 0:D
AUX_ROWS = AUX_SIG_ROW + T * B  # 32

NOISE_OFF = 0
CURX_OFF = A
CURY_OFF = A + 1
CURANG_OFF = A + 2

# packed output columns: [pred_x, pred_y, revenue, done, new_x, new_y, new_angle]


def composite_kernel(w_ref, aux_ref, out_ref):
    w = w_ref[...]            # (W_ROWS, NL)  bf16 weights
    aux = aux_ref[...]        # (AUX_ROWS, NL) f32 biases + activations

    # ---- unpack weights once (off the recurrence chain) ---------------------
    w_hh = w[W_HH_ROW:W_HH_ROW + H, :]                 # (H, 4H)
    whh_i = w_hh[:, 0 * H:1 * H]
    whh_f = w_hh[:, 1 * H:2 * H]
    whh_g = w_hh[:, 2 * H:3 * H]
    whh_o = w_hh[:, 3 * H:4 * H]
    w_ih = w[W_IH_ROW:W_IH_ROW + D, :]                 # (D, 4H)
    w_head = w[W_HEAD_ROW:W_HEAD_ROW + H, :]           # (H, NL)
    w_res2 = w[W_RES2_ROW:W_RES2_ROW + H, :]           # (H, NL)

    b_lstm = aux[AUX_BLSTM_ROW:AUX_BLSTM_ROW + 1, :]   # (1, 4H)
    b_head = aux[AUX_BHEAD_ROW:AUX_BHEAD_ROW + 1, :]   # (1, NL)
    b_res2 = aux[AUX_BRES2_ROW:AUX_BRES2_ROW + 1, :]   # (1, NL)
    misc = aux[AUX_MISC_ROW:AUX_MISC_ROW + B, :]       # (B, NL)
    signal = aux[AUX_SIG_ROW:AUX_SIG_ROW + T * B, 0:D]  # (T*B, D) time-major

    # ---- hoisted input projection: one (T*B, D)@(D, 4H) matmul --------------
    x_proj = jnp.dot(signal.astype(jnp.bfloat16), w_ih,
                     preferred_element_type=jnp.float32) + b_lstm   # (T*B, 4H)

    # pre-extract per-gate / per-step pieces above the loop (independent of h)
    xi = x_proj[:, 0 * H:1 * H]
    xf = x_proj[:, 1 * H:2 * H]
    xg = x_proj[:, 2 * H:3 * H]
    xo = x_proj[:, 3 * H:4 * H]
    xs = [(xi[t * B:(t + 1) * B, :], xf[t * B:(t + 1) * B, :],
           xg[t * B:(t + 1) * B, :], xo[t * B:(t + 1) * B, :]) for t in range(T)]

    # ---- LSTM recurrence: fully unrolled, gate-blocked bf16 matmuls ---------
    h = jnp.zeros((B, H), jnp.float32)
    c = jnp.zeros((B, H), jnp.float32)
    for t in range(T):
        hb = h.astype(jnp.bfloat16)
        x_i, x_f, x_g, x_o = xs[t]
        g_i = x_i + jnp.dot(hb, whh_i, preferred_element_type=jnp.float32)
        g_f = x_f + jnp.dot(hb, whh_f, preferred_element_type=jnp.float32)
        g_g = x_g + jnp.dot(hb, whh_g, preferred_element_type=jnp.float32)
        g_o = x_o + jnp.dot(hb, whh_o, preferred_element_type=jnp.float32)
        i_t = jax.nn.sigmoid(g_i)
        f_t = jax.nn.sigmoid(g_f)
        o_t = jax.nn.sigmoid(g_o)
        g_t = jnp.tanh(g_g)
        c = f_t * c + i_t * g_t
        h = o_t * jnp.tanh(c)
    ht = h                                            # (B, H)

    # ---- fused heads: one (B,H)@(H,NL) matmul --------------------------------
    heads = jnp.dot(ht.astype(jnp.bfloat16), w_head,
                    preferred_element_type=jnp.float32) + b_head
    res_hidden = heads[:, RES1_OFF:RES1_OFF + H]
    mean = heads[:, MEAN_OFF:MEAN_OFF + A]
    log_std = jnp.clip(heads[:, LOGSTD_OFF:LOGSTD_OFF + A], LOGSTD_MIN, LOGSTD_MAX)
    revenue = heads[:, VALUE_OFF:VALUE_OFF + 1]
    done_logit = heads[:, DONE_OFF:DONE_OFF + 1]

    noise = misc[:, NOISE_OFF:NOISE_OFF + A]
    cur_x = misc[:, CURX_OFF:CURX_OFF + 1]
    cur_y = misc[:, CURY_OFF:CURY_OFF + 1]
    cur_ang = misc[:, CURANG_OFF:CURANG_OFF + 1]

    # SAC select_action(evaluate=False): reparameterized tanh-squashed sample.
    # TODO(synk): deterministic eval (tanh(mean)) / optional action rescaling are
    # handled by gating `noise` / scaling outside the kernel.
    action = jnp.tanh(mean + jnp.exp(log_std) * noise)          # (B, A)
    done = (done_logit > 0.0).astype(jnp.float32)               # == sigmoid > 0.5

    # residual predictor: pred = (ht + relu(W1 ht + b1)) @ W2 + b2
    res = ht + jnp.maximum(res_hidden, 0.0)
    pred_xy = (jnp.dot(res.astype(jnp.bfloat16), w_res2,
                       preferred_element_type=jnp.float32) + b_res2)[:, 0:2]

    # kinematic position update (EUP sin/cos; otherwise idle)
    steering = action[:, 0:1]
    throttle = action[:, 1:2]
    new_ang = cur_ang + steering * DT
    new_x = cur_x + throttle * jnp.cos(new_ang)
    new_y = cur_y + throttle * jnp.sin(new_ang)

    # ---- direct column-sliced stores (no concatenate / relayout) ------------
    out_ref[...] = jnp.zeros((B, NL), jnp.float32)
    out_ref[:, 0:2] = pred_xy
    out_ref[:, 2:3] = revenue
    out_ref[:, 3:4] = done
    out_ref[:, 4:5] = new_x
    out_ref[:, 5:6] = new_y
    out_ref[:, 6:7] = new_ang


# ---------------------------- host-side packing ------------------------------
def pack_weight_slab(p):
    """All weight matrices -> one bf16 (W_ROWS, NL) slab. Done once at init."""
    w = jnp.zeros((W_ROWS, NL), jnp.float32)
    w = w.at[W_HH_ROW:W_HH_ROW + H, 0:G4].set(p["w_hh"])
    w = w.at[W_IH_ROW:W_IH_ROW + D, 0:G4].set(p["w_ih"])
    w_head = jnp.concatenate(
        [p["w_res1"], p["w_mean"], p["w_logstd"], p["w_value"], p["w_done"]], axis=1)
    w = w.at[W_HEAD_ROW:W_HEAD_ROW + H, 0:w_head.shape[1]].set(w_head)
    w = w.at[W_RES2_ROW:W_RES2_ROW + H, 0:2].set(p["w_res2"])
    return w.astype(jnp.bfloat16)


def pack_bias_block(p):
    """All biases -> f32 (AUX_MISC_ROW, NL) block (top of the aux slab)."""
    b = jnp.zeros((AUX_MISC_ROW, NL), jnp.float32)
    b = b.at[AUX_BLSTM_ROW, 0:G4].set(p["b_lstm"][0])
    b_head = jnp.concatenate(
        [p["b_res1"], p["b_mean"], p["b_logstd"], p["b_value"], p["b_done"]], axis=1)
    b = b.at[AUX_BHEAD_ROW, 0:b_head.shape[1]].set(b_head[0])
    b = b.at[AUX_BRES2_ROW, 0:2].set(p["b_res2"][0])
    return b


@jax.jit
def composite_forward(w_slab, bias_block, signal_btd, noise,
                      current_x, current_y, current_angle):
    """signal_btd: (B, T, D), batch_first like the PyTorch LSTM input."""
    # per-call activation rows: misc (B, NL) then time-major signal (T*B, NL)
    misc = jnp.concatenate([noise, current_x, current_y, current_angle], axis=1)
    misc = jnp.pad(misc, ((0, 0), (0, NL - misc.shape[1])))
    sig = jnp.transpose(signal_btd, (1, 0, 2)).reshape(T * B, D)
    sig = jnp.pad(sig, ((0, 0), (0, NL - D)))
    filler = jnp.zeros((AUX_SIG_ROW - AUX_MISC_ROW - B, NL), jnp.float32)
    aux = jnp.concatenate([bias_block, misc, filler, sig], axis=0)   # (AUX_ROWS, NL)

    out = pl.pallas_call(
        composite_kernel,
        out_shape=jax.ShapeDtypeStruct((B, NL), jnp.float32),
        in_specs=[pl.BlockSpec(memory_space=pltpu.MemorySpace.VMEM),
                  pl.BlockSpec(memory_space=pltpu.MemorySpace.VMEM)],
        out_specs=pl.BlockSpec(memory_space=pltpu.MemorySpace.VMEM),
    )(w_slab, aux)

    pred_xy = out[:, 0:2]
    revenue = out[:, 2:3]
    done = out[:, 3:4]
    new_x = out[:, 4:5]
    new_y = out[:, 5:6]
    new_angle = out[:, 6:7]
    return pred_xy, revenue, done, new_x, new_y, new_angle


# ---------------------------- reference & params ------------------------------
def reference_forward(p, signal_btd, noise, cur_x, cur_y, cur_ang):
    """Pure-JAX f32 reference of the same forward pass."""
    h = jnp.zeros((B, H), jnp.float32)
    c = jnp.zeros((B, H), jnp.float32)
    for t in range(T):
        x_t = signal_btd[:, t, :]
        gates = x_t @ p["w_ih"] + h @ p["w_hh"] + p["b_lstm"]
        i_t = jax.nn.sigmoid(gates[:, 0:H])
        f_t = jax.nn.sigmoid(gates[:, H:2 * H])
        g_t = jnp.tanh(gates[:, 2 * H:3 * H])
        o_t = jax.nn.sigmoid(gates[:, 3 * H:4 * H])
        c = f_t * c + i_t * g_t
        h = o_t * jnp.tanh(c)
    ht = h
    mean = ht @ p["w_mean"] + p["b_mean"]
    log_std = jnp.clip(ht @ p["w_logstd"] + p["b_logstd"], LOGSTD_MIN, LOGSTD_MAX)
    revenue = ht @ p["w_value"] + p["b_value"]
    done = (jax.nn.sigmoid(ht @ p["w_done"] + p["b_done"]) > 0.5).astype(jnp.float32)
    action = jnp.tanh(mean + jnp.exp(log_std) * noise)
    res = ht + jax.nn.relu(ht @ p["w_res1"] + p["b_res1"])
    pred_xy = res @ p["w_res2"] + p["b_res2"]
    new_ang = cur_ang + action[:, 0:1] * DT
    new_x = cur_x + action[:, 1:2] * jnp.cos(new_ang)
    new_y = cur_y + action[:, 1:2] * jnp.sin(new_ang)
    return pred_xy, revenue, done, new_x, new_y, new_ang


def init_params(key):
    ks = jax.random.split(key, 16)
    n = lambda k, shape, s=0.1: (s * jax.random.normal(k, shape)).astype(jnp.float32)
    return {
        "w_ih":     n(ks[0], (D, 4 * H)),     # gate column order (i, f, g, o), torch-style
        "w_hh":     n(ks[1], (H, 4 * H)),
        "b_lstm":   n(ks[2], (1, 4 * H)),     # = torch b_ih + b_hh
        "w_mean":   n(ks[3], (H, A)),
        "b_mean":   n(ks[4], (1, A)),
        "w_logstd": n(ks[5], (H, A)),
        "b_logstd": n(ks[6], (1, A)),
        "w_value":  n(ks[7], (H, 1)),
        "b_value":  n(ks[8], (1, 1)),
        "w_done":   n(ks[9], (H, 1)),
        "b_done":   n(ks[10], (1, 1)),
        "w_res1":   n(ks[11], (H, H)),
        "b_res1":   n(ks[12], (1, H)),
        "w_res2":   n(ks[13], (H, 2)),
        "b_res2":   n(ks[14], (1, 2)),
    }


if __name__ == "__main__":
    key = jax.random.PRNGKey(0)
    k_sig, k_noise, k_x, k_y, k_ang, k_par = jax.random.split(key, 6)

    signal = jax.random.normal(k_sig, (B, T, D), dtype=jnp.float32)
    noise = jax.random.normal(k_noise, (B, A), dtype=jnp.float32)   # evaluate=False sample
    current_x = jax.random.normal(k_x, (B, 1), dtype=jnp.float32)
    current_y = jax.random.normal(k_y, (B, 1), dtype=jnp.float32)
    current_angle = jax.random.normal(k_ang, (B, 1), dtype=jnp.float32)
    params = init_params(k_par)

    # parameter packing hoisted out of the per-call path (done once)
    w_slab = pack_weight_slab(params)
    bias_block = pack_bias_block(params)

    outs = composite_forward(w_slab, bias_block, signal, noise,
                             current_x, current_y, current_angle)
    outs = jax.block_until_ready(outs)

    pred_xy, revenue, done, new_x, new_y, new_angle = outs
    assert pred_xy.shape == (B, 2) and revenue.shape == (B, 1) and done.shape == (B, 1)
    assert new_x.shape == (B, 1) and new_y.shape == (B, 1) and new_angle.shape == (B, 1)

    # sanity-check against the pure-JAX f32 reference (loose tol: bf16 MXU inputs)
    ref = reference_forward(params, signal, noise, current_x, current_y, current_angle)
    names = ["pred_xy", "revenue", "done", "new_x", "new_y", "new_angle"]
    for name, got, exp in zip(names, outs, ref):
        if name == "done":
            assert bool(jnp.all((got == 0.0) | (got == 1.0))), name
        else:
            assert bool(jnp.allclose(got, exp, atol=0.1, rtol=0.1)), name

    print("KERNEL_OK")
</pallas_src>

<mosaic_0001>
module attributes {stable_mosaic.version = 11 : i64} {
  func.func @composite_kernel(%arg0: memref<112x128xbf16, #tpu.memory_space<vmem>>, %arg1: memref<32x128xf32, #tpu.memory_space<vmem>>, %arg2: memref<2x128xf32, #tpu.memory_space<vmem>>) attributes {dimension_semantics = [], scalar_prefetch = 0 : i64, scratch_operands = 0 : i64, tpu.core_type = #tpu.core_type<tc>} {
    %c0 = arith.constant 0 : index
    %c0_0 = arith.constant 0 : index
    %0 = vector.load %arg0[%c0, %c0_0] : memref<112x128xbf16, #tpu.memory_space<vmem>>, vector<112x128xbf16>
    %c0_1 = arith.constant 0 : index
    %c0_2 = arith.constant 0 : index
    %1 = vector.load %arg1[%c0_1, %c0_2] : memref<32x128xf32, #tpu.memory_space<vmem>>, vector<32x128xf32>
    %2 = vector.extract_strided_slice %0 {offsets = [0, 0], sizes = [32, 128], strides = [1, 1]} : vector<112x128xbf16> to vector<32x128xbf16>
    %3 = vector.extract_strided_slice %2 {offsets = [0, 0], sizes = [32, 32], strides = [1, 1]} : vector<32x128xbf16> to vector<32x32xbf16>
    %4 = vector.extract_strided_slice %2 {offsets = [0, 32], sizes = [32, 32], strides = [1, 1]} : vector<32x128xbf16> to vector<32x32xbf16>
    %5 = vector.extract_strided_slice %2 {offsets = [0, 64], sizes = [32, 32], strides = [1, 1]} : vector<32x128xbf16> to vector<32x32xbf16>
    %6 = vector.extract_strided_slice %2 {offsets = [0, 96], sizes = [32, 32], strides = [1, 1]} : vector<32x128xbf16> to vector<32x32xbf16>
    %7 = vector.extract_strided_slice %0 {offsets = [32, 0], sizes = [4, 128], strides = [1, 1]} : vector<112x128xbf16> to vector<4x128xbf16>
    %8 = vector.extract_strided_slice %0 {offsets = [48, 0], sizes = [32, 128], strides = [1, 1]} : vector<112x128xbf16> to vector<32x128xbf16>
    %9 = vector.extract_strided_slice %0 {offsets = [80, 0], sizes = [32, 128], strides = [1, 1]} : vector<112x128xbf16> to vector<32x128xbf16>
    %10 = vector.extract_strided_slice %1 {offsets = [0, 0], sizes = [1, 128], strides = [1, 1]} : vector<32x128xf32> to vector<1x128xf32>
    %11 = vector.extract_strided_slice %1 {offsets = [1, 0], sizes = [1, 128], strides = [1, 1]} : vector<32x128xf32> to vector<1x128xf32>
    %12 = vector.extract_strided_slice %1 {offsets = [2, 0], sizes = [1, 128], strides = [1, 1]} : vector<32x128xf32> to vector<1x128xf32>
    %13 = vector.extract_strided_slice %1 {offsets = [8, 0], sizes = [2, 128], strides = [1, 1]} : vector<32x128xf32> to vector<2x128xf32>
    %14 = vector.extract_strided_slice %1 {offsets = [16, 0], sizes = [16, 4], strides = [1, 1]} : vector<32x128xf32> to vector<16x4xf32>
    %15 = arith.truncf %14 : vector<16x4xf32> to vector<16x4xbf16>
    %cst = arith.constant dense<0.000000e+00> : vector<16x128xf32>
    %16 = tpu.matmul %15, %7, %cst {dimension_numbers = #tpu.dot_dimension_numbers<[1], [0], [0], [1], [0, 0, 1, 1], [], []>} : vector<16x4xbf16>, vector<4x128xbf16>, vector<16x128xf32> -> vector<16x128xf32>
    %17 = vector.broadcast %10 : vector<1x128xf32> to vector<16x128xf32>
    %18 = arith.addf %16, %17 : vector<16x128xf32>
    %19 = vector.extract_strided_slice %18 {offsets = [0, 0], sizes = [16, 32], strides = [1, 1]} : vector<16x128xf32> to vector<16x32xf32>
    %20 = vector.extract_strided_slice %18 {offsets = [0, 32], sizes = [16, 32], strides = [1, 1]} : vector<16x128xf32> to vector<16x32xf32>
    %21 = vector.extract_strided_slice %18 {offsets = [0, 64], sizes = [16, 32], strides = [1, 1]} : vector<16x128xf32> to vector<16x32xf32>
    %22 = vector.extract_strided_slice %18 {offsets = [0, 96], sizes = [16, 32], strides = [1, 1]} : vector<16x128xf32> to vector<16x32xf32>
    %23 = vector.extract_strided_slice %19 {offsets = [0, 0], sizes = [2, 32], strides = [1, 1]} : vector<16x32xf32> to vector<2x32xf32>
    %24 = vector.extract_strided_slice %20 {offsets = [0, 0], sizes = [2, 32], strides = [1, 1]} : vector<16x32xf32> to vector<2x32xf32>
    %25 = vector.extract_strided_slice %21 {offsets = [0, 0], sizes = [2, 32], strides = [1, 1]} : vector<16x32xf32> to vector<2x32xf32>
    %26 = vector.extract_strided_slice %22 {offsets = [0, 0], sizes = [2, 32], strides = [1, 1]} : vector<16x32xf32> to vector<2x32xf32>
    %27 = vector.extract_strided_slice %19 {offsets = [2, 0], sizes = [2, 32], strides = [1, 1]} : vector<16x32xf32> to vector<2x32xf32>
    %28 = vector.extract_strided_slice %20 {offsets = [2, 0], sizes = [2, 32], strides = [1, 1]} : vector<16x32xf32> to vector<2x32xf32>
    %29 = vector.extract_strided_slice %21 {offsets = [2, 0], sizes = [2, 32], strides = [1, 1]} : vector<16x32xf32> to vector<2x32xf32>
    %30 = vector.extract_strided_slice %22 {offsets = [2, 0], sizes = [2, 32], strides = [1, 1]} : vector<16x32xf32> to vector<2x32xf32>
    %31 = vector.extract_strided_slice %19 {offsets = [4, 0], sizes = [2, 32], strides = [1, 1]} : vector<16x32xf32> to vector<2x32xf32>
    %32 = vector.extract_strided_slice %20 {offsets = [4, 0], sizes = [2, 32], strides = [1, 1]} : vector<16x32xf32> to vector<2x32xf32>
    %33 = vector.extract_strided_slice %21 {offsets = [4, 0], sizes = [2, 32], strides = [1, 1]} : vector<16x32xf32> to vector<2x32xf32>
    %34 = vector.extract_strided_slice %22 {offsets = [4, 0], sizes = [2, 32], strides = [1, 1]} : vector<16x32xf32> to vector<2x32xf32>
    %35 = vector.extract_strided_slice %19 {offsets = [6, 0], sizes = [2, 32], strides = [1, 1]} : vector<16x32xf32> to vector<2x32xf32>
    %36 = vector.extract_strided_slice %20 {offsets = [6, 0], sizes = [2, 32], strides = [1, 1]} : vector<16x32xf32> to vector<2x32xf32>
    %37 = vector.extract_strided_slice %21 {offsets = [6, 0], sizes = [2, 32], strides = [1, 1]} : vector<16x32xf32> to vector<2x32xf32>
    %38 = vector.extract_strided_slice %22 {offsets = [6, 0], sizes = [2, 32], strides = [1, 1]} : vector<16x32xf32> to vector<2x32xf32>
    %39 = vector.extract_strided_slice %19 {offsets = [8, 0], sizes = [2, 32], strides = [1, 1]} : vector<16x32xf32> to vector<2x32xf32>
    %40 = vector.extract_strided_slice %20 {offsets = [8, 0], sizes = [2, 32], strides = [1, 1]} : vector<16x32xf32> to vector<2x32xf32>
    %41 = vector.extract_strided_slice %21 {offsets = [8, 0], sizes = [2, 32], strides = [1, 1]} : vector<16x32xf32> to vector<2x32xf32>
    %42 = vector.extract_strided_slice %22 {offsets = [8, 0], sizes = [2, 32], strides = [1, 1]} : vector<16x32xf32> to vector<2x32xf32>
    %43 = vector.extract_strided_slice %19 {offsets = [10, 0], sizes = [2, 32], strides = [1, 1]} : vector<16x32xf32> to vector<2x32xf32>
    %44 = vector.extract_strided_slice %20 {offsets = [10, 0], sizes = [2, 32], strides = [1, 1]} : vector<16x32xf32> to vector<2x32xf32>
    %45 = vector.extract_strided_slice %21 {offsets = [10, 0], sizes = [2, 32], strides = [1, 1]} : vector<16x32xf32> to vector<2x32xf32>
    %46 = vector.extract_strided_slice %22 {offsets = [10, 0], sizes = [2, 32], strides = [1, 1]} : vector<16x32xf32> to vector<2x32xf32>
    %47 = vector.extract_strided_slice %19 {offsets = [12, 0], sizes = [2, 32], strides = [1, 1]} : vector<16x32xf32> to vector<2x32xf32>
    %48 = vector.extract_strided_slice %20 {offsets = [12, 0], sizes = [2, 32], strides = [1, 1]} : vector<16x32xf32> to vector<2x32xf32>
    %49 = vector.extract_strided_slice %21 {offsets = [12, 0], sizes = [2, 32], strides = [1, 1]} : vector<16x32xf32> to vector<2x32xf32>
    %50 = vector.extract_strided_slice %22 {offsets = [12, 0], sizes = [2, 32], strides = [1, 1]} : vector<16x32xf32> to vector<2x32xf32>
    %51 = vector.extract_strided_slice %19 {offsets = [14, 0], sizes = [2, 32], strides = [1, 1]} : vector<16x32xf32> to vector<2x32xf32>
    %52 = vector.extract_strided_slice %20 {offsets = [14, 0], sizes = [2, 32], strides = [1, 1]} : vector<16x32xf32> to vector<2x32xf32>
    %53 = vector.extract_strided_slice %21 {offsets = [14, 0], sizes = [2, 32], strides = [1, 1]} : vector<16x32xf32> to vector<2x32xf32>
    %54 = vector.extract_strided_slice %22 {offsets = [14, 0], sizes = [2, 32], strides = [1, 1]} : vector<16x32xf32> to vector<2x32xf32>
    %cst_3 = arith.constant 0.000000e+00 : f32
    %55 = vector.broadcast %cst_3 : f32 to vector<2x32xf32>
    %cst_4 = arith.constant 0.000000e+00 : f32
    %56 = vector.broadcast %cst_4 : f32 to vector<2x32xf32>
    %57 = arith.truncf %55 : vector<2x32xf32> to vector<2x32xbf16>
    %cst_5 = arith.constant dense<0.000000e+00> : vector<2x32xf32>
    %58 = tpu.matmul %57, %3, %cst_5 {dimension_numbers = #tpu.dot_dimension_numbers<[1], [0], [0], [1], [0, 0, 1, 1], [], []>} : vector<2x32xbf16>, vector<32x32xbf16>, vector<2x32xf32> -> vector<2x32xf32>
    %59 = arith.addf %23, %58 : vector<2x32xf32>
    %cst_6 = arith.constant dense<0.000000e+00> : vector<2x32xf32>
    %60 = tpu.matmul %57, %4, %cst_6 {dimension_numbers = #tpu.dot_dimension_numbers<[1], [0], [0], [1], [0, 0, 1, 1], [], []>} : vector<2x32xbf16>, vector<32x32xbf16>, vector<2x32xf32> -> vector<2x32xf32>
    %61 = arith.addf %24, %60 : vector<2x32xf32>
    %cst_7 = arith.constant dense<0.000000e+00> : vector<2x32xf32>
    %62 = tpu.matmul %57, %5, %cst_7 {dimension_numbers = #tpu.dot_dimension_numbers<[1], [0], [0], [1], [0, 0, 1, 1], [], []>} : vector<2x32xbf16>, vector<32x32xbf16>, vector<2x32xf32> -> vector<2x32xf32>
    %63 = arith.addf %25, %62 : vector<2x32xf32>
    %cst_8 = arith.constant dense<0.000000e+00> : vector<2x32xf32>
    %64 = tpu.matmul %57, %6, %cst_8 {dimension_numbers = #tpu.dot_dimension_numbers<[1], [0], [0], [1], [0, 0, 1, 1], [], []>} : vector<2x32xbf16>, vector<32x32xbf16>, vector<2x32xf32> -> vector<2x32xf32>
    %65 = arith.addf %26, %64 : vector<2x32xf32>
    %66 = arith.negf %59 : vector<2x32xf32>
    %67 = math.exp %66 : vector<2x32xf32>
    %cst_9 = arith.constant 1.000000e+00 : f32
    %68 = vector.broadcast %cst_9 : f32 to vector<2x32xf32>
    %69 = arith.addf %68, %67 : vector<2x32xf32>
    %70 = arith.divf %68, %69 : vector<2x32xf32>
    %71 = arith.negf %61 : vector<2x32xf32>
    %72 = math.exp %71 : vector<2x32xf32>
    %cst_10 = arith.constant 1.000000e+00 : f32
    %73 = vector.broadcast %cst_10 : f32 to vector<2x32xf32>
    %74 = arith.addf %73, %72 : vector<2x32xf32>
    %75 = arith.divf %73, %74 : vector<2x32xf32>
    %76 = arith.negf %65 : vector<2x32xf32>
    %77 = math.exp %76 : vector<2x32xf32>
    %cst_11 = arith.constant 1.000000e+00 : f32
    %78 = vector.broadcast %cst_11 : f32 to vector<2x32xf32>
    %79 = arith.addf %78, %77 : vector<2x32xf32>
    %80 = arith.divf %78, %79 : vector<2x32xf32>
    %81 = math.tanh %63 : vector<2x32xf32>
    %82 = arith.mulf %75, %56 : vector<2x32xf32>
    %83 = arith.mulf %70, %81 : vector<2x32xf32>
    %84 = arith.addf %82, %83 : vector<2x32xf32>
    %85 = math.tanh %84 : vector<2x32xf32>
    %86 = arith.mulf %80, %85 : vector<2x32xf32>
    %87 = arith.truncf %86 : vector<2x32xf32> to vector<2x32xbf16>
    %cst_12 = arith.constant dense<0.000000e+00> : vector<2x32xf32>
    %88 = tpu.matmul %87, %3, %cst_12 {dimension_numbers = #tpu.dot_dimension_numbers<[1], [0], [0], [1], [0, 0, 1, 1], [], []>} : vector<2x32xbf16>, vector<32x32xbf16>, vector<2x32xf32> -> vector<2x32xf32>
    %89 = arith.addf %27, %88 : vector<2x32xf32>
    %cst_13 = arith.constant dense<0.000000e+00> : vector<2x32xf32>
    %90 = tpu.matmul %87, %4, %cst_13 {dimension_numbers = #tpu.dot_dimension_numbers<[1], [0], [0], [1], [0, 0, 1, 1], [], []>} : vector<2x32xbf16>, vector<32x32xbf16>, vector<2x32xf32> -> vector<2x32xf32>
    %91 = arith.addf %28, %90 : vector<2x32xf32>
    %cst_14 = arith.constant dense<0.000000e+00> : vector<2x32xf32>
    %92 = tpu.matmul %87, %5, %cst_14 {dimension_numbers = #tpu.dot_dimension_numbers<[1], [0], [0], [1], [0, 0, 1, 1], [], []>} : vector<2x32xbf16>, vector<32x32xbf16>, vector<2x32xf32> -> vector<2x32xf32>
    %93 = arith.addf %29, %92 : vector<2x32xf32>
    %cst_15 = arith.constant dense<0.000000e+00> : vector<2x32xf32>
    %94 = tpu.matmul %87, %6, %cst_15 {dimension_numbers = #tpu.dot_dimension_numbers<[1], [0], [0], [1], [0, 0, 1, 1], [], []>} : vector<2x32xbf16>, vector<32x32xbf16>, vector<2x32xf32> -> vector<2x32xf32>
    %95 = arith.addf %30, %94 : vector<2x32xf32>
    %96 = arith.negf %89 : vector<2x32xf32>
    %97 = math.exp %96 : vector<2x32xf32>
    %cst_16 = arith.constant 1.000000e+00 : f32
    %98 = vector.broadcast %cst_16 : f32 to vector<2x32xf32>
    %99 = arith.addf %98, %97 : vector<2x32xf32>
    %100 = arith.divf %98, %99 : vector<2x32xf32>
    %101 = arith.negf %91 : vector<2x32xf32>
    %102 = math.exp %101 : vector<2x32xf32>
    %cst_17 = arith.constant 1.000000e+00 : f32
    %103 = vector.broadcast %cst_17 : f32 to vector<2x32xf32>
    %104 = arith.addf %103, %102 : vector<2x32xf32>
    %105 = arith.divf %103, %104 : vector<2x32xf32>
    %106 = arith.negf %95 : vector<2x32xf32>
    %107 = math.exp %106 : vector<2x32xf32>
    %cst_18 = arith.constant 1.000000e+00 : f32
    %108 = vector.broadcast %cst_18 : f32 to vector<2x32xf32>
    %109 = arith.addf %108, %107 : vector<2x32xf32>
    %110 = arith.divf %108, %109 : vector<2x32xf32>
    %111 = math.tanh %93 : vector<2x32xf32>
    %112 = arith.mulf %105, %84 : vector<2x32xf32>
    %113 = arith.mulf %100, %111 : vector<2x32xf32>
    %114 = arith.addf %112, %113 : vector<2x32xf32>
    %115 = math.tanh %114 : vector<2x32xf32>
    %116 = arith.mulf %110, %115 : vector<2x32xf32>
    %117 = arith.truncf %116 : vector<2x32xf32> to vector<2x32xbf16>
    %cst_19 = arith.constant dense<0.000000e+00> : vector<2x32xf32>
    %118 = tpu.matmul %117, %3, %cst_19 {dimension_numbers = #tpu.dot_dimension_numbers<[1], [0], [0], [1], [0, 0, 1, 1], [], []>} : vector<2x32xbf16>, vector<32x32xbf16>, vector<2x32xf32> -> vector<2x32xf32>
    %119 = arith.addf %31, %118 : vector<2x32xf32>
    %cst_20 = arith.constant dense<0.000000e+00> : vector<2x32xf32>
    %120 = tpu.matmul %117, %4, %cst_20 {dimension_numbers = #tpu.dot_dimension_numbers<[1], [0], [0], [1], [0, 0, 1, 1], [], []>} : vector<2x32xbf16>, vector<32x32xbf16>, vector<2x32xf32> -> vector<2x32xf32>
    %121 = arith.addf %32, %120 : vector<2x32xf32>
    %cst_21 = arith.constant dense<0.000000e+00> : vector<2x32xf32>
    %122 = tpu.matmul %117, %5, %cst_21 {dimension_numbers = #tpu.dot_dimension_numbers<[1], [0], [0], [1], [0, 0, 1, 1], [], []>} : vector<2x32xbf16>, vector<32x32xbf16>, vector<2x32xf32> -> vector<2x32xf32>
    %123 = arith.addf %33, %122 : vector<2x32xf32>
    %cst_22 = arith.constant dense<0.000000e+00> : vector<2x32xf32>
    %124 = tpu.matmul %117, %6, %cst_22 {dimension_numbers = #tpu.dot_dimension_numbers<[1], [0], [0], [1], [0, 0, 1, 1], [], []>} : vector<2x32xbf16>, vector<32x32xbf16>, vector<2x32xf32> -> vector<2x32xf32>
    %125 = arith.addf %34, %124 : vector<2x32xf32>
    %126 = arith.negf %119 : vector<2x32xf32>
    %127 = math.exp %126 : vector<2x32xf32>
    %cst_23 = arith.constant 1.000000e+00 : f32
    %128 = vector.broadcast %cst_23 : f32 to vector<2x32xf32>
    %129 = arith.addf %128, %127 : vector<2x32xf32>
    %130 = arith.divf %128, %129 : vector<2x32xf32>
    %131 = arith.negf %121 : vector<2x32xf32>
    %132 = math.exp %131 : vector<2x32xf32>
    %cst_24 = arith.constant 1.000000e+00 : f32
    %133 = vector.broadcast %cst_24 : f32 to vector<2x32xf32>
    %134 = arith.addf %133, %132 : vector<2x32xf32>
    %135 = arith.divf %133, %134 : vector<2x32xf32>
    %136 = arith.negf %125 : vector<2x32xf32>
    %137 = math.exp %136 : vector<2x32xf32>
    %cst_25 = arith.constant 1.000000e+00 : f32
    %138 = vector.broadcast %cst_25 : f32 to vector<2x32xf32>
    %139 = arith.addf %138, %137 : vector<2x32xf32>
    %140 = arith.divf %138, %139 : vector<2x32xf32>
    %141 = math.tanh %123 : vector<2x32xf32>
    %142 = arith.mulf %135, %114 : vector<2x32xf32>
    %143 = arith.mulf %130, %141 : vector<2x32xf32>
    %144 = arith.addf %142, %143 : vector<2x32xf32>
    %145 = math.tanh %144 : vector<2x32xf32>
    %146 = arith.mulf %140, %145 : vector<2x32xf32>
    %147 = arith.truncf %146 : vector<2x32xf32> to vector<2x32xbf16>
    %cst_26 = arith.constant dense<0.000000e+00> : vector<2x32xf32>
    %148 = tpu.matmul %147, %3, %cst_26 {dimension_numbers = #tpu.dot_dimension_numbers<[1], [0], [0], [1], [0, 0, 1, 1], [], []>} : vector<2x32xbf16>, vector<32x32xbf16>, vector<2x32xf32> -> vector<2x32xf32>
    %149 = arith.addf %35, %148 : vector<2x32xf32>
    %cst_27 = arith.constant dense<0.000000e+00> : vector<2x32xf32>
    %150 = tpu.matmul %147, %4, %cst_27 {dimension_numbers = #tpu.dot_dimension_numbers<[1], [0], [0], [1], [0, 0, 1, 1], [], []>} : vector<2x32xbf16>, vector<32x32xbf16>, vector<2x32xf32> -> vector<2x32xf32>
    %151 = arith.addf %36, %150 : vector<2x32xf32>
    %cst_28 = arith.constant dense<0.000000e+00> : vector<2x32xf32>
    %152 = tpu.matmul %147, %5, %cst_28 {dimension_numbers = #tpu.dot_dimension_numbers<[1], [0], [0], [1], [0, 0, 1, 1], [], []>} : vector<2x32xbf16>, vector<32x32xbf16>, vector<2x32xf32> -> vector<2x32xf32>
    %153 = arith.addf %37, %152 : vector<2x32xf32>
    %cst_29 = arith.constant dense<0.000000e+00> : vector<2x32xf32>
    %154 = tpu.matmul %147, %6, %cst_29 {dimension_numbers = #tpu.dot_dimension_numbers<[1], [0], [0], [1], [0, 0, 1, 1], [], []>} : vector<2x32xbf16>, vector<32x32xbf16>, vector<2x32xf32> -> vector<2x32xf32>
    %155 = arith.addf %38, %154 : vector<2x32xf32>
    %156 = arith.negf %149 : vector<2x32xf32>
    %157 = math.exp %156 : vector<2x32xf32>
    %cst_30 = arith.constant 1.000000e+00 : f32
    %158 = vector.broadcast %cst_30 : f32 to vector<2x32xf32>
    %159 = arith.addf %158, %157 : vector<2x32xf32>
    %160 = arith.divf %158, %159 : vector<2x32xf32>
    %161 = arith.negf %151 : vector<2x32xf32>
    %162 = math.exp %161 : vector<2x32xf32>
    %cst_31 = arith.constant 1.000000e+00 : f32
    %163 = vector.broadcast %cst_31 : f32 to vector<2x32xf32>
    %164 = arith.addf %163, %162 : vector<2x32xf32>
    %165 = arith.divf %163, %164 : vector<2x32xf32>
    %166 = arith.negf %155 : vector<2x32xf32>
    %167 = math.exp %166 : vector<2x32xf32>
    %cst_32 = arith.constant 1.000000e+00 : f32
    %168 = vector.broadcast %cst_32 : f32 to vector<2x32xf32>
    %169 = arith.addf %168, %167 : vector<2x32xf32>
    %170 = arith.divf %168, %169 : vector<2x32xf32>
    %171 = math.tanh %153 : vector<2x32xf32>
    %172 = arith.mulf %165, %144 : vector<2x32xf32>
    %173 = arith.mulf %160, %171 : vector<2x32xf32>
    %174 = arith.addf %172, %173 : vector<2x32xf32>
    %175 = math.tanh %174 : vector<2x32xf32>
    %176 = arith.mulf %170, %175 : vector<2x32xf32>
    %177 = arith.truncf %176 : vector<2x32xf32> to vector<2x32xbf16>
    %cst_33 = arith.constant dense<0.000000e+00> : vector<2x32xf32>
    %178 = tpu.matmul %177, %3, %cst_33 {dimension_numbers = #tpu.dot_dimension_numbers<[1], [0], [0], [1], [0, 0, 1, 1], [], []>} : vector<2x32xbf16>, vector<32x32xbf16>, vector<2x32xf32> -> vector<2x32xf32>
    %179 = arith.addf %39, %178 : vector<2x32xf32>
    %cst_34 = arith.constant dense<0.000000e+00> : vector<2x32xf32>
    %180 = tpu.matmul %177, %4, %cst_34 {dimension_numbers = #tpu.dot_dimension_numbers<[1], [0], [0], [1], [0, 0, 1, 1], [], []>} : vector<2x32xbf16>, vector<32x32xbf16>, vector<2x32xf32> -> vector<2x32xf32>
    %181 = arith.addf %40, %180 : vector<2x32xf32>
    %cst_35 = arith.constant dense<0.000000e+00> : vector<2x32xf32>
    %182 = tpu.matmul %177, %5, %cst_35 {dimension_numbers = #tpu.dot_dimension_numbers<[1], [0], [0], [1], [0, 0, 1, 1], [], []>} : vector<2x32xbf16>, vector<32x32xbf16>, vector<2x32xf32> -> vector<2x32xf32>
    %183 = arith.addf %41, %182 : vector<2x32xf32>
    %cst_36 = arith.constant dense<0.000000e+00> : vector<2x32xf32>
    %184 = tpu.matmul %177, %6, %cst_36 {dimension_numbers = #tpu.dot_dimension_numbers<[1], [0], [0], [1], [0, 0, 1, 1], [], []>} : vector<2x32xbf16>, vector<32x32xbf16>, vector<2x32xf32> -> vector<2x32xf32>
    %185 = arith.addf %42, %184 : vector<2x32xf32>
    %186 = arith.negf %179 : vector<2x32xf32>
    %187 = math.exp %186 : vector<2x32xf32>
    %cst_37 = arith.constant 1.000000e+00 : f32
    %188 = vector.broadcast %cst_37 : f32 to vector<2x32xf32>
    %189 = arith.addf %188, %187 : vector<2x32xf32>
    %190 = arith.divf %188, %189 : vector<2x32xf32>
    %191 = arith.negf %181 : vector<2x32xf32>
    %192 = math.exp %191 : vector<2x32xf32>
    %cst_38 = arith.constant 1.000000e+00 : f32
    %193 = vector.broadcast %cst_38 : f32 to vector<2x32xf32>
    %194 = arith.addf %193, %192 : vector<2x32xf32>
    %195 = arith.divf %193, %194 : vector<2x32xf32>
    %196 = arith.negf %185 : vector<2x32xf32>
    %197 = math.exp %196 : vector<2x32xf32>
    %cst_39 = arith.constant 1.000000e+00 : f32
    %198 = vector.broadcast %cst_39 : f32 to vector<2x32xf32>
    %199 = arith.addf %198, %197 : vector<2x32xf32>
    %200 = arith.divf %198, %199 : vector<2x32xf32>
    %201 = math.tanh %183 : vector<2x32xf32>
    %202 = arith.mulf %195, %174 : vector<2x32xf32>
    %203 = arith.mulf %190, %201 : vector<2x32xf32>
    %204 = arith.addf %202, %203 : vector<2x32xf32>
    %205 = math.tanh %204 : vector<2x32xf32>
    %206 = arith.mulf %200, %205 : vector<2x32xf32>
    %207 = arith.truncf %206 : vector<2x32xf32> to vector<2x32xbf16>
    %cst_40 = arith.constant dense<0.000000e+00> : vector<2x32xf32>
    %208 = tpu.matmul %207, %3, %cst_40 {dimension_numbers = #tpu.dot_dimension_numbers<[1], [0], [0], [1], [0, 0, 1, 1], [], []>} : vector<2x32xbf16>, vector<32x32xbf16>, vector<2x32xf32> -> vector<2x32xf32>
    %209 = arith.addf %43, %208 : vector<2x32xf32>
    %cst_41 = arith.constant dense<0.000000e+00> : vector<2x32xf32>
    %210 = tpu.matmul %207, %4, %cst_41 {dimension_numbers = #tpu.dot_dimension_numbers<[1], [0], [0], [1], [0, 0, 1, 1], [], []>} : vector<2x32xbf16>, vector<32x32xbf16>, vector<2x32xf32> -> vector<2x32xf32>
    %211 = arith.addf %44, %210 : vector<2x32xf32>
    %cst_42 = arith.constant dense<0.000000e+00> : vector<2x32xf32>
    %212 = tpu.matmul %207, %5, %cst_42 {dimension_numbers = #tpu.dot_dimension_numbers<[1], [0], [0], [1], [0, 0, 1, 1], [], []>} : vector<2x32xbf16>, vector<32x32xbf16>, vector<2x32xf32> -> vector<2x32xf32>
    %213 = arith.addf %45, %212 : vector<2x32xf32>
    %cst_43 = arith.constant dense<0.000000e+00> : vector<2x32xf32>
    %214 = tpu.matmul %207, %6, %cst_43 {dimension_numbers = #tpu.dot_dimension_numbers<[1], [0], [0], [1], [0, 0, 1, 1], [], []>} : vector<2x32xbf16>, vector<32x32xbf16>, vector<2x32xf32> -> vector<2x32xf32>
    %215 = arith.addf %46, %214 : vector<2x32xf32>
    %216 = arith.negf %209 : vector<2x32xf32>
    %217 = math.exp %216 : vector<2x32xf32>
    %cst_44 = arith.constant 1.000000e+00 : f32
    %218 = vector.broadcast %cst_44 : f32 to vector<2x32xf32>
    %219 = arith.addf %218, %217 : vector<2x32xf32>
    %220 = arith.divf %218, %219 : vector<2x32xf32>
    %221 = arith.negf %211 : vector<2x32xf32>
    %222 = math.exp %221 : vector<2x32xf32>
    %cst_45 = arith.constant 1.000000e+00 : f32
    %223 = vector.broadcast %cst_45 : f32 to vector<2x32xf32>
    %224 = arith.addf %223, %222 : vector<2x32xf32>
    %225 = arith.divf %223, %224 : vector<2x32xf32>
    %226 = arith.negf %215 : vector<2x32xf32>
    %227 = math.exp %226 : vector<2x32xf32>
    %cst_46 = arith.constant 1.000000e+00 : f32
    %228 = vector.broadcast %cst_46 : f32 to vector<2x32xf32>
    %229 = arith.addf %228, %227 : vector<2x32xf32>
    %230 = arith.divf %228, %229 : vector<2x32xf32>
    %231 = math.tanh %213 : vector<2x32xf32>
    %232 = arith.mulf %225, %204 : vector<2x32xf32>
    %233 = arith.mulf %220, %231 : vector<2x32xf32>
    %234 = arith.addf %232, %233 : vector<2x32xf32>
    %235 = math.tanh %234 : vector<2x32xf32>
    %236 = arith.mulf %230, %235 : vector<2x32xf32>
    %237 = arith.truncf %236 : vector<2x32xf32> to vector<2x32xbf16>
    %cst_47 = arith.constant dense<0.000000e+00> : vector<2x32xf32>
    %238 = tpu.matmul %237, %3, %cst_47 {dimension_numbers = #tpu.dot_dimension_numbers<[1], [0], [0], [1], [0, 0, 1, 1], [], []>} : vector<2x32xbf16>, vector<32x32xbf16>, vector<2x32xf32> -> vector<2x32xf32>
    %239 = arith.addf %47, %238 : vector<2x32xf32>
    %cst_48 = arith.constant dense<0.000000e+00> : vector<2x32xf32>
    %240 = tpu.matmul %237, %4, %cst_48 {dimension_numbers = #tpu.dot_dimension_numbers<[1], [0], [0], [1], [0, 0, 1, 1], [], []>} : vector<2x32xbf16>, vector<32x32xbf16>, vector<2x32xf32> -> vector<2x32xf32>
    %241 = arith.addf %48, %240 : vector<2x32xf32>
    %cst_49 = arith.constant dense<0.000000e+00> : vector<2x32xf32>
    %242 = tpu.matmul %237, %5, %cst_49 {dimension_numbers = #tpu.dot_dimension_numbers<[1], [0], [0], [1], [0, 0, 1, 1], [], []>} : vector<2x32xbf16>, vector<32x32xbf16>, vector<2x32xf32> -> vector<2x32xf32>
    %243 = arith.addf %49, %242 : vector<2x32xf32>
    %cst_50 = arith.constant dense<0.000000e+00> : vector<2x32xf32>
    %244 = tpu.matmul %237, %6, %cst_50 {dimension_numbers = #tpu.dot_dimension_numbers<[1], [0], [0], [1], [0, 0, 1, 1], [], []>} : vector<2x32xbf16>, vector<32x32xbf16>, vector<2x32xf32> -> vector<2x32xf32>
    %245 = arith.addf %50, %244 : vector<2x32xf32>
    %246 = arith.negf %239 : vector<2x32xf32>
    %247 = math.exp %246 : vector<2x32xf32>
    %cst_51 = arith.constant 1.000000e+00 : f32
    %248 = vector.broadcast %cst_51 : f32 to vector<2x32xf32>
    %249 = arith.addf %248, %247 : vector<2x32xf32>
    %250 = arith.divf %248, %249 : vector<2x32xf32>
    %251 = arith.negf %241 : vector<2x32xf32>
    %252 = math.exp %251 : vector<2x32xf32>
    %cst_52 = arith.constant 1.000000e+00 : f32
    %253 = vector.broadcast %cst_52 : f32 to vector<2x32xf32>
    %254 = arith.addf %253, %252 : vector<2x32xf32>
    %255 = arith.divf %253, %254 : vector<2x32xf32>
    %256 = arith.negf %245 : vector<2x32xf32>
    %257 = math.exp %256 : vector<2x32xf32>
    %cst_53 = arith.constant 1.000000e+00 : f32
    %258 = vector.broadcast %cst_53 : f32 to vector<2x32xf32>
    %259 = arith.addf %258, %257 : vector<2x32xf32>
    %260 = arith.divf %258, %259 : vector<2x32xf32>
    %261 = math.tanh %243 : vector<2x32xf32>
    %262 = arith.mulf %255, %234 : vector<2x32xf32>
    %263 = arith.mulf %250, %261 : vector<2x32xf32>
    %264 = arith.addf %262, %263 : vector<2x32xf32>
    %265 = math.tanh %264 : vector<2x32xf32>
    %266 = arith.mulf %260, %265 : vector<2x32xf32>
    %267 = arith.truncf %266 : vector<2x32xf32> to vector<2x32xbf16>
    %cst_54 = arith.constant dense<0.000000e+00> : vector<2x32xf32>
    %268 = tpu.matmul %267, %3, %cst_54 {dimension_numbers = #tpu.dot_dimension_numbers<[1], [0], [0], [1], [0, 0, 1, 1], [], []>} : vector<2x32xbf16>, vector<32x32xbf16>, vector<2x32xf32> -> vector<2x32xf32>
    %269 = arith.addf %51, %268 : vector<2x32xf32>
    %cst_55 = arith.constant dense<0.000000e+00> : vector<2x32xf32>
    %270 = tpu.matmul %267, %4, %cst_55 {dimension_numbers = #tpu.dot_dimension_numbers<[1], [0], [0], [1], [0, 0, 1, 1], [], []>} : vector<2x32xbf16>, vector<32x32xbf16>, vector<2x32xf32> -> vector<2x32xf32>
    %271 = arith.addf %52, %270 : vector<2x32xf32>
    %cst_56 = arith.constant dense<0.000000e+00> : vector<2x32xf32>
    %272 = tpu.matmul %267, %5, %cst_56 {dimension_numbers = #tpu.dot_dimension_numbers<[1], [0], [0], [1], [0, 0, 1, 1], [], []>} : vector<2x32xbf16>, vector<32x32xbf16>, vector<2x32xf32> -> vector<2x32xf32>
    %273 = arith.addf %53, %272 : vector<2x32xf32>
    %cst_57 = arith.constant dense<0.000000e+00> : vector<2x32xf32>
    %274 = tpu.matmul %267, %6, %cst_57 {dimension_numbers = #tpu.dot_dimension_numbers<[1], [0], [0], [1], [0, 0, 1, 1], [], []>} : vector<2x32xbf16>, vector<32x32xbf16>, vector<2x32xf32> -> vector<2x32xf32>
    %275 = arith.addf %54, %274 : vector<2x32xf32>
    %276 = arith.negf %269 : vector<2x32xf32>
    %277 = math.exp %276 : vector<2x32xf32>
    %cst_58 = arith.constant 1.000000e+00 : f32
    %278 = vector.broadcast %cst_58 : f32 to vector<2x32xf32>
    %279 = arith.addf %278, %277 : vector<2x32xf32>
    %280 = arith.divf %278, %279 : vector<2x32xf32>
    %281 = arith.negf %271 : vector<2x32xf32>
    %282 = math.exp %281 : vector<2x32xf32>
    %cst_59 = arith.constant 1.000000e+00 : f32
    %283 = vector.broadcast %cst_59 : f32 to vector<2x32xf32>
    %284 = arith.addf %283, %282 : vector<2x32xf32>
    %285 = arith.divf %283, %284 : vector<2x32xf32>
    %286 = arith.negf %275 : vector<2x32xf32>
    %287 = math.exp %286 : vector<2x32xf32>
    %cst_60 = arith.constant 1.000000e+00 : f32
    %288 = vector.broadcast %cst_60 : f32 to vector<2x32xf32>
    %289 = arith.addf %288, %287 : vector<2x32xf32>
    %290 = arith.divf %288, %289 : vector<2x32xf32>
    %291 = math.tanh %273 : vector<2x32xf32>
    %292 = arith.mulf %285, %264 : vector<2x32xf32>
    %293 = arith.mulf %280, %291 : vector<2x32xf32>
    %294 = arith.addf %292, %293 : vector<2x32xf32>
    %295 = math.tanh %294 : vector<2x32xf32>
    %296 = arith.mulf %290, %295 : vector<2x32xf32>
    %297 = arith.truncf %296 : vector<2x32xf32> to vector<2x32xbf16>
    %cst_61 = arith.constant dense<0.000000e+00> : vector<2x128xf32>
    %298 = tpu.matmul %297, %8, %cst_61 {dimension_numbers = #tpu.dot_dimension_numbers<[1], [0], [0], [1], [0, 0, 1, 1], [], []>} : vector<2x32xbf16>, vector<32x128xbf16>, vector<2x128xf32> -> vector<2x128xf32>
    %299 = vector.broadcast %11 : vector<1x128xf32> to vector<2x128xf32>
    %300 = arith.addf %298, %299 : vector<2x128xf32>
    %301 = vector.extract_strided_slice %300 {offsets = [0, 0], sizes = [2, 32], strides = [1, 1]} : vector<2x128xf32> to vector<2x32xf32>
    %302 = vector.extract_strided_slice %300 {offsets = [0, 32], sizes = [2, 2], strides = [1, 1]} : vector<2x128xf32> to vector<2x2xf32>
    %303 = vector.extract_strided_slice %300 {offsets = [0, 34], sizes = [2, 2], strides = [1, 1]} : vector<2x128xf32> to vector<2x2xf32>
    %cst_62 = arith.constant -2.000000e+01 : f32
    %cst_63 = arith.constant 2.000000e+00 : f32
    %304 = vector.broadcast %cst_62 : f32 to vector<2x2xf32>
    %305 = arith.maximumf %304, %303 : vector<2x2xf32>
    %306 = vector.broadcast %cst_63 : f32 to vector<2x2xf32>
    %307 = arith.minimumf %306, %305 : vector<2x2xf32>
    %308 = vector.extract_strided_slice %300 {offsets = [0, 36], sizes = [2, 1], strides = [1, 1]} : vector<2x128xf32> to vector<2x1xf32>
    %309 = vector.extract_strided_slice %300 {offsets = [0, 37], sizes = [2, 1], strides = [1, 1]} : vector<2x128xf32> to vector<2x1xf32>
    %310 = vector.extract_strided_slice %13 {offsets = [0, 0], sizes = [2, 2], strides = [1, 1]} : vector<2x128xf32> to vector<2x2xf32>
    %311 = vector.extract_strided_slice %13 {offsets = [0, 2], sizes = [2, 1], strides = [1, 1]} : vector<2x128xf32> to vector<2x1xf32>
    %312 = vector.extract_strided_slice %13 {offsets = [0, 3], sizes = [2, 1], strides = [1, 1]} : vector<2x128xf32> to vector<2x1xf32>
    %313 = vector.extract_strided_slice %13 {offsets = [0, 4], sizes = [2, 1], strides = [1, 1]} : vector<2x128xf32> to vector<2x1xf32>
    %314 = math.exp %307 : vector<2x2xf32>
    %315 = arith.mulf %314, %310 : vector<2x2xf32>
    %316 = arith.addf %302, %315 : vector<2x2xf32>
    %317 = math.tanh %316 : vector<2x2xf32>
    %cst_64 = arith.constant 0.000000e+00 : f32
    %318 = vector.broadcast %cst_64 : f32 to vector<2x1xf32>
    %319 = arith.cmpf ogt, %309, %318 : vector<2x1xf32>
    %320 = arith.extui %319 : vector<2x1xi1> to vector<2x1xi32>
    %321 = arith.sitofp %320 : vector<2x1xi32> to vector<2x1xf32>
    %cst_65 = arith.constant 0.000000e+00 : f32
    %322 = vector.broadcast %cst_65 : f32 to vector<2x32xf32>
    %323 = arith.maximumf %301, %322 : vector<2x32xf32>
    %324 = arith.addf %296, %323 : vector<2x32xf32>
    %325 = arith.truncf %324 : vector<2x32xf32> to vector<2x32xbf16>
    %cst_66 = arith.constant dense<0.000000e+00> : vector<2x128xf32>
    %326 = tpu.matmul %325, %9, %cst_66 {dimension_numbers = #tpu.dot_dimension_numbers<[1], [0], [0], [1], [0, 0, 1, 1], [], []>} : vector<2x32xbf16>, vector<32x128xbf16>, vector<2x128xf32> -> vector<2x128xf32>
    %327 = vector.broadcast %12 : vector<1x128xf32> to vector<2x128xf32>
    %328 = arith.addf %326, %327 : vector<2x128xf32>
    %329 = vector.extract_strided_slice %328 {offsets = [0, 0], sizes = [2, 2], strides = [1, 1]} : vector<2x128xf32> to vector<2x2xf32>
    %330 = vector.extract_strided_slice %317 {offsets = [0, 0], sizes = [2, 1], strides = [1, 1]} : vector<2x2xf32> to vector<2x1xf32>
    %331 = vector.extract_strided_slice %317 {offsets = [0, 1], sizes = [2, 1], strides = [1, 1]} : vector<2x2xf32> to vector<2x1xf32>
    %cst_67 = arith.constant 1.000000e-01 : f32
    %332 = vector.broadcast %cst_67 : f32 to vector<2x1xf32>
    %333 = arith.mulf %330, %332 : vector<2x1xf32>
    %334 = arith.addf %313, %333 : vector<2x1xf32>
    %335 = math.cos %334 : vector<2x1xf32>
    %336 = arith.mulf %331, %335 : vector<2x1xf32>
    %337 = arith.addf %311, %336 : vector<2x1xf32>
    %338 = math.sin %334 : vector<2x1xf32>
    %339 = arith.mulf %331, %338 : vector<2x1xf32>
    %340 = arith.addf %312, %339 : vector<2x1xf32>
    %cst_68 = arith.constant 0.000000e+00 : f32
    %341 = vector.broadcast %cst_68 : f32 to vector<2x128xf32>
    %c0_69 = arith.constant 0 : index
    %c0_70 = arith.constant 0 : index
    %342 = vector.load %arg2[%c0_69, %c0_70] : memref<2x128xf32, #tpu.memory_space<vmem>>, vector<2x128xf32>
    tpu.vector_store %arg2[%c0_69, %c0_70], %341 {strides = array<i32>} : memref<2x128xf32, #tpu.memory_space<vmem>>, vector<2x128xf32>,
    %c0_71 = arith.constant 0 : index
    %c0_72 = arith.constant 0 : index
    %343 = vector.load %arg2[%c0_71, %c0_72] : memref<2x128xf32, #tpu.memory_space<vmem>>, vector<2x2xf32>
    tpu.vector_store %arg2[%c0_71, %c0_72], %329 {strides = array<i32>} : memref<2x128xf32, #tpu.memory_space<vmem>>, vector<2x2xf32>,
    %c0_73 = arith.constant 0 : index
    %c2 = arith.constant 2 : index
    %344 = vector.load %arg2[%c0_73, %c2] : memref<2x128xf32, #tpu.memory_space<vmem>>, vector<2x1xf32>
    tpu.vector_store %arg2[%c0_73, %c2], %308 {strides = array<i32>} : memref<2x128xf32, #tpu.memory_space<vmem>>, vector<2x1xf32>,
    %c0_74 = arith.constant 0 : index
    %c3 = arith.constant 3 : index
    %345 = vector.load %arg2[%c0_74, %c3] : memref<2x128xf32, #tpu.memory_space<vmem>>, vector<2x1xf32>
    tpu.vector_store %arg2[%c0_74, %c3], %321 {strides = array<i32>} : memref<2x128xf32, #tpu.memory_space<vmem>>, vector<2x1xf32>,
    %c0_75 = arith.constant 0 : index
    %c4 = arith.constant 4 : index
    %346 = vector.load %arg2[%c0_75, %c4] : memref<2x128xf32, #tpu.memory_space<vmem>>, vector<2x1xf32>
    tpu.vector_store %arg2[%c0_75, %c4], %337 {strides = array<i32>} : memref<2x128xf32, #tpu.memory_space<vmem>>, vector<2x1xf32>,
    %c0_76 = arith.constant 0 : index
    %c5 = arith.constant 5 : index
    %347 = vector.load %arg2[%c0_76, %c5] : memref<2x128xf32, #tpu.memory_space<vmem>>, vector<2x1xf32>
    tpu.vector_store %arg2[%c0_76, %c5], %340 {strides = array<i32>} : memref<2x128xf32, #tpu.memory_space<vmem>>, vector<2x1xf32>,
    %c0_77 = arith.constant 0 : index
    %c6 = arith.constant 6 : index
    %348 = vector.load %arg2[%c0_77, %c6] : memref<2x128xf32, #tpu.memory_space<vmem>>, vector<2x1xf32>
    tpu.vector_store %arg2[%c0_77, %c6], %334 {strides = array<i32>} : memref<2x128xf32, #tpu.memory_space<vmem>>, vector<2x1xf32>,
    return
  }
}

</mosaic_0001>

<llo_original>
// kernel: composite_forward.1
$region0: #{composite_forward.1}
  #allocation0 [shape = 'u32[]', space=smem, size = 0x4, offset = 0x4, fixed_abs, tag = 'smem constant byte address 0x4 - core index']
  #allocation1 [shape = 'u32[144,128]{1,0:T(1,128)}', space=vmem, size = 0x12000, scoped, tag = 'internal scratch']
  %s0 = inlined_call_operand.vmem [shape: bf16[112,128], index: 0, kind: input, shape index: {}]
  %s1 = inlined_call_operand.vmem [shape: f32[32,128], index: 1, kind: input, shape index: {}]
  %s2 = inlined_call_operand.vmem [shape: f32[2,128], index: 2, kind: output, shape index: {}]
  %s3 = sld [smem:[#allocation0]]
  $region18: #{composite_forward.1} parent=0
    _
  %s5 = ssub.s32 1, %s3
  %s6 = scalar_select 0, %s5, %s3
  // Predicated region
  $region2: #{composite_forward.1} parent=0 // pred_check
    _
  $region3: #{composite_forward.1} parent=0 // pred_check_branch
    %8 = sbr.rel (0) target = $region5
  $region4: #{composite_forward.1} parent=0 // pred_region
    _
  $region5: #{composite_forward.1} parent=0 // pred_fallthru
    _
  // Predicated region
  $region6: #{composite_forward.1} parent=0 // pred_check
    _
  $region7: #{composite_forward.1} parent=0 // pred_check_branch
    %10 = sbr.rel (0) target = $region9
  $region8: #{composite_forward.1} parent=0 // pred_region
    _
  $region9: #{composite_forward.1} parent=0 // pred_fallthru
    _
  %v12 = vld [vmem:[%s0] sm:$0xf]
  %v13 = vld [vmem:[%s0 + $0x4] sm:$0xf]
  %v14 = vld [vmem:[%s0 + $0x8] sm:$0xf]
  %v15 = vld [vmem:[%s0 + $0xc] sm:$0xf]
  %v16 = vld [vmem:[%s0 + $0x10] sm:$0xf]
  %v17 = vld [vmem:[%s0 + $0x18] sm:$0xf]
  %v18 = vld [vmem:[%s0 + $0x1c] sm:$0xf]
  %v19 = vld [vmem:[%s0 + $0x20] sm:$0xf]
  %v20 = vld [vmem:[%s0 + $0x24] sm:$0xf]
  %v21 = vld [vmem:[%s0 + $0x28] sm:$0xf]
  %v22 = vld [vmem:[%s0 + $0x2c] sm:$0xf]
  %v23 = vld [vmem:[%s0 + $0x30] sm:$0xf]
  %v24 = vld [vmem:[%s0 + $0x34] sm:$0xf]
  %v25 = vld [vmem:[%s1] sm:$0xff]
  %v26 = vld [vmem:[%s1 + $0x8] sm:$0xff]
  %v27 = vld [vmem:[%s1 + $0x10] sm:$0xff]
  %v28 = vld [vmem:[%s1 + $0x18] sm:$0xff]
  %v29 = vpack.c.bf16 %v28, %v27
  %v30 = vlaneseq
  %v31 = vshrl.u32 %v30, 7
  %v32 = vsub.s32 0, %v31
  %v33 = vrot.slane %v25, %v32
  %vm34 = vcmask 31744
  %v36 = vsel %vm34, %v29, 0
  %vm38 = vcmask 1041408
  %v40 = vsel %vm38, %v16, 0
  %42 = vmatprep.subr.bf16.mxu0 0
  %43 = vmatpush1.bf16.msra.mxu0 %v40
  %44 = vmatprep.subr.bf16.mxu0 0
  %45 = vmatpush1.bf16.msra.mxu0 0
  %46 = vmatprep.subr.bf16.mxu0 0
  %47 = vmatpush1.bf16.msra.mxu0 0
  %48 = vmatprep.subr.bf16.mxu0 0
  %49 = vmatpush1.bf16.msra.mxu0 0
  %50 = vmatprep.subr.bf16.mxu0 0
  %51 = vmatpush1.bf16.msra.mxu0 0
  %52 = vmatprep.subr.bf16.mxu0 0
  %53 = vmatpush1.bf16.msra.mxu0 0
  %54 = vmatprep.subr.bf16.mxu0 0
  %55 = vmatpush1.bf16.msra.mxu0 0
  %56 = vmatprep.subr.bf16.mxu0 0
  %57 = vmatpush1.bf16.msra.mxu0 0
  %58 = vmatprep.subr.bf16.mxu0 0
  %59 = vmatpush1.bf16.msra.mxu0 0
  %60 = vmatprep.subr.bf16.mxu0 0
  %61 = vmatpush1.bf16.msra.mxu0 0
  %62 = vmatprep.subr.bf16.mxu0 0
  %63 = vmatpush1.bf16.msra.mxu0 0
  %64 = vmatprep.subr.bf16.mxu0 0
  %65 = vmatpush1.bf16.msra.mxu0 0
  %66 = vmatprep.subr.bf16.mxu0 0
  %67 = vmatpush1.bf16.msra.mxu0 0
  %68 = vmatprep.subr.bf16.mxu0 0
  %69 = vmatpush1.bf16.msra.mxu0 0
  %70 = vmatprep.subr.bf16.mxu0 0
  %71 = vmatpush1.bf16.msra.mxu0 0
  %72 = vmatprep.subr.bf16.mxu0 0
  %73 = vmatpush1.bf16.msra.mxu0 0
  %74 = vmatprep.mubr.bf16.mxu0 0
  %75 = vmatmul.mubr.bf16.gmra.mrb[0].mxu0 %v36
  %v76 = vpop.f32.mrb[0].mxu0
  %v77 = vadd.f32 %v33, %v76
  %v78 = vpop.f32.mrb[0].mxu0
  %v79 = vpop.f32.mrb[0].mxu0
  %v80 = vadd.f32 %v33, %v79
  %v81 = vpop.f32.mrb[0].mxu0
  %82 = vdwg.mxu0
  %v87 = vunpack.c.l.b16 %v12
  %v88 = vunpack.c.l.b16 %v13
  %v89 = vunpack.c.l.b16 %v14
  %v90 = vunpack.c.l.b16 %v15
  %v91 = vpack.c.b16 %v88, %v87
  %v92 = vpack.c.b16 %v90, %v89
  %vm95 = vcmask 261120
  %v97 = vsel %vm95, 0, 0
  %99 = vmatprep.subr.bf16.mxu0 0
  %100 = vmatpush1.bf16.msra.mxu0 %v91
  %101 = vmatprep.subr.bf16.mxu0 0
  %102 = vmatpush1.bf16.msra.mxu0 %v92
  %103 = vmatprep.subr.bf16.mxu0 0
  %104 = vmatpush1.bf16.msra.mxu0 0
  %105 = vmatprep.subr.bf16.mxu0 0
  %106 = vmatpush1.bf16.msra.mxu0 0
  %107 = vmatprep.subr.bf16.mxu0 0
  %108 = vmatpush1.bf16.msra.mxu0 0
  %109 = vmatprep.subr.bf16.mxu0 0
  %110 = vmatpush1.bf16.msra.mxu0 0
  %111 = vmatprep.subr.bf16.mxu0 0
  %112 = vmatpush1.bf16.msra.mxu0 0
  %113 = vmatprep.subr.bf16.mxu0 0
  %114 = vmatpush1.bf16.msra.mxu0 0
  %115 = vmatprep.subr.bf16.mxu0 0
  %116 = vmatpush1.bf16.msra.mxu0 0
  %117 = vmatprep.subr.bf16.mxu0 0
  %118 = vmatpush1.bf16.msra.mxu0 0
  %119 = vmatprep.subr.bf16.mxu0 0
  %120 = vmatpush1.bf16.msra.mxu0 0
  %121 = vmatprep.subr.bf16.mxu0 0
  %122 = vmatpush1.bf16.msra.mxu0 0
  %123 = vmatprep.subr.bf16.mxu0 0
  %124 = vmatpush1.bf16.msra.mxu0 0
  %125 = vmatprep.subr.bf16.mxu0 0
  %126 = vmatpush1.bf16.msra.mxu0 0
  %127 = vmatprep.subr.bf16.mxu0 0
  %128 = vmatpush1.bf16.msra.mxu0 0
  %129 = vmatprep.subr.bf16.mxu0 0
  %130 = vmatpush1.bf16.msra.mxu0 0
  %131 = vmatprep.mubr.bf16.mxu0 0
  %132 = vmatmul.mubr.bf16.gmra.mrb[0].mxu0 %v97
  %v133 = vpop.f32.mrb[0].mxu0
  %v134 = vadd.f32 0.0, %v133
  %v135 = vpop.f32.mrb[0].mxu0
  %v136 = vpop.f32.mrb[0].mxu0
  %v137 = vpop.f32.mrb[0].mxu0
  %138 = vdwg.mxu0
  %v139 = vadd.f32 %v77, %v134
  %140 = vrot.lane.b32.xlu0 %v91, 96
  %v141 = vpop.permute.xlu0 %140
  %142 = vrot.lane.b32.xlu0 %v92, 96
  %v143 = vpop.permute.xlu0 %142
  %146 = vmatprep.subr.bf16.mxu0 0
  %147 = vmatpush1.bf16.msra.mxu0 %v141
  %148 = vmatprep.subr.bf16.mxu0 0
  %149 = vmatpush1.bf16.msra.mxu0 %v143
  %150 = vmatprep.subr.bf16.mxu0 0
  %151 = vmatpush1.bf16.msra.mxu0 0
  %152 = vmatprep.subr.bf16.mxu0 0
  %153 = vmatpush1.bf16.msra.mxu0 0
  %154 = vmatprep.subr.bf16.mxu0 0
  %155 = vmatpush1.bf16.msra.mxu0 0
  %156 = vmatprep.subr.bf16.mxu0 0
  %157 = vmatpush1.bf16.msra.mxu0 0
  %158 = vmatprep.subr.bf16.mxu0 0
  %159 = vmatpush1.bf16.msra.mxu0 0
  %160 = vmatprep.subr.bf16.mxu0 0
  %161 = vmatpush1.bf16.msra.mxu0 0
  %162 = vmatprep.subr.bf16.mxu0 0
  %163 = vmatpush1.bf16.msra.mxu0 0
  %164 = vmatprep.subr.bf16.mxu0 0
  %165 = vmatpush1.bf16.msra.mxu0 0
  %166 = vmatprep.subr.bf16.mxu0 0
  %167 = vmatpush1.bf16.msra.mxu0 0
  %168 = vmatprep.subr.bf16.mxu0 0
  %169 = vmatpush1.bf16.msra.mxu0 0
  %170 = vmatprep.subr.bf16.mxu0 0
  %171 = vmatpush1.bf16.msra.mxu0 0
  %172 = vmatprep.subr.bf16.mxu0 0
  %173 = vmatpush1.bf16.msra.mxu0 0
  %174 = vmatprep.subr.bf16.mxu0 0
  %175 = vmatpush1.bf16.msra.mxu0 0
  %176 = vmatprep.subr.bf16.mxu0 0
  %177 = vmatpush1.bf16.msra.mxu0 0
  %178 = vmatprep.mubr.bf16.mxu0 0
  %179 = vmatmul.mubr.bf16.gmra.mrb[0].mxu0 %v97
  %v180 = vpop.f32.mrb[0].mxu0
  %v181 = vadd.f32 0.0, %v180
  %v182 = vpop.f32.mrb[0].mxu0
  %v183 = vpop.f32.mrb[0].mxu0
  %v184 = vpop.f32.mrb[0].mxu0
  %185 = vdwg.mxu0
  %187 = vrot.lane.b32.xlu0 %v181, 32
  %v188 = vpop.permute.xlu0 %187
  %v190 = vadd.f32 %v77, %v188
  %191 = vrot.lane.b32.xlu0 %v91, 64
  %v192 = vpop.permute.xlu0 %191
  %193 = vrot.lane.b32.xlu0 %v92, 64
  %v194 = vpop.permute.xlu0 %193
  %197 = vmatprep.subr.bf16.mxu0 0
  %198 = vmatpush1.bf16.msra.mxu0 %v192
  %199 = vmatprep.subr.bf16.mxu0 0
  %200 = vmatpush1.bf16.msra.mxu0 %v194
  %201 = vmatprep.subr.bf16.mxu0 0
  %202 = vmatpush1.bf16.msra.mxu0 0
  %203 = vmatprep.subr.bf16.mxu0 0
  %204 = vmatpush1.bf16.msra.mxu0 0
  %205 = vmatprep.subr.bf16.mxu0 0
  %206 = vmatpush1.bf16.msra.mxu0 0
  %207 = vmatprep.subr.bf16.mxu0 0
  %208 = vmatpush1.bf16.msra.mxu0 0
  %209 = vmatprep.subr.bf16.mxu0 0
  %210 = vmatpush1.bf16.msra.mxu0 0
  %211 = vmatprep.subr.bf16.mxu0 0
  %212 = vmatpush1.bf16.msra.mxu0 0
  %213 = vmatprep.subr.bf16.mxu0 0
  %214 = vmatpush1.bf16.msra.mxu0 0
  %215 = vmatprep.subr.bf16.mxu0 0
  %216 = vmatpush1.bf16.msra.mxu0 0
  %217 = vmatprep.subr.bf16.mxu0 0
  %218 = vmatpush1.bf16.msra.mxu0 0
  %219 = vmatprep.subr.bf16.mxu0 0
  %220 = vmatpush1.bf16.msra.mxu0 0
  %221 = vmatprep.subr.bf16.mxu0 0
  %222 = vmatpush1.bf16.msra.mxu0 0
  %223 = vmatprep.subr.bf16.mxu0 0
  %224 = vmatpush1.bf16.msra.mxu0 0
  %225 = vmatprep.subr.bf16.mxu0 0
  %226 = vmatpush1.bf16.msra.mxu0 0
  %227 = vmatprep.subr.bf16.mxu0 0
  %228 = vmatpush1.bf16.msra.mxu0 0
  %229 = vmatprep.mubr.bf16.mxu0 0
  %230 = vmatmul.mubr.bf16.gmra.mrb[0].mxu0 %v97
  %v231 = vpop.f32.mrb[0].mxu0
  %v232 = vadd.f32 0.0, %v231
  %v233 = vpop.f32.mrb[0].mxu0
  %v234 = vpop.f32.mrb[0].mxu0
  %v235 = vpop.f32.mrb[0].mxu0
  %236 = vdwg.mxu0
  %238 = vrot.lane.b32.xlu0 %v232, 64
  %v239 = vpop.permute.xlu0 %238
  %v241 = vadd.f32 %v77, %v239
  %242 = vrot.lane.b32.xlu0 %v91, 32
  %v243 = vpop.permute.xlu0 %242
  %244 = vrot.lane.b32.xlu0 %v92, 32
  %v245 = vpop.permute.xlu0 %244
  %248 = vmatprep.subr.bf16.mxu0 0
  %249 = vmatpush1.bf16.msra.mxu0 %v243
  %250 = vmatprep.subr.bf16.mxu0 0
  %251 = vmatpush1.bf16.msra.mxu0 %v245
  %252 = vmatprep.subr.bf16.mxu0 0
  %253 = vmatpush1.bf16.msra.mxu0 0
  %254 = vmatprep.subr.bf16.mxu0 0
  %255 = vmatpush1.bf16.msra.mxu0 0
  %256 = vmatprep.subr.bf16.mxu0 0
  %257 = vmatpush1.bf16.msra.mxu0 0
  %258 = vmatprep.subr.bf16.mxu0 0
  %259 = vmatpush1.bf16.msra.mxu0 0
  %260 = vmatprep.subr.bf16.mxu0 0
  %261 = vmatpush1.bf16.msra.mxu0 0
  %262 = vmatprep.subr.bf16.mxu0 0
  %263 = vmatpush1.bf16.msra.mxu0 0
  %264 = vmatprep.subr.bf16.mxu0 0
  %265 = vmatpush1.bf16.msra.mxu0 0
  %266 = vmatprep.subr.bf16.mxu0 0
  %267 = vmatpush1.bf16.msra.mxu0 0
  %268 = vmatprep.subr.bf16.mxu0 0
  %269 = vmatpush1.bf16.msra.mxu0 0
  %270 = vmatprep.subr.bf16.mxu0 0
  %271 = vmatpush1.bf16.msra.mxu0 0
  %272 = vmatprep.subr.bf16.mxu0 0
  %273 = vmatpush1.bf16.msra.mxu0 0
  %274 = vmatprep.subr.bf16.mxu0 0
  %275 = vmatpush1.bf16.msra.mxu0 0
  %276 = vmatprep.subr.bf16.mxu0 0
  %277 = vmatpush1.bf16.msra.mxu0 0
  %278 = vmatprep.subr.bf16.mxu0 0
  %279 = vmatpush1.bf16.msra.mxu0 0
  %280 = vmatprep.mubr.bf16.mxu0 0
  %281 = vmatmul.mubr.bf16.gmra.mrb[0].mxu0 %v97
  %v282 = vpop.f32.mrb[0].mxu0
  %v283 = vadd.f32 0.0, %v282
  %v284 = vpop.f32.mrb[0].mxu0
  %v285 = vpop.f32.mrb[0].mxu0
  %v286 = vpop.f32.mrb[0].mxu0
  %287 = vdwg.mxu0
  %289 = vrot.lane.b32.xlu0 %v283, 96
  %v290 = vpop.permute.xlu0 %289
  %v292 = vadd.f32 %v77, %v290
  %v293 = vxor.u32 %v139, 2147483648
  %v294 = vmul.f32 %v293, 1.442695
  %v295 = vpow.pop %v294
  %v296 = vadd.f32 %v295, 1.0
  %v297 = vrcp.pop %v296
  %v298 = vmul.f32 1.0, %v297
  %v299 = vxor.u32 %v190, 2147483648
  %v300 = vmul.f32 %v299, 1.442695
  %v301 = vpow.pop %v300
  %v302 = vadd.f32 %v301, 1.0
  %v303 = vrcp.pop %v302
  %v304 = vmul.f32 1.0, %v303
  %v305 = vxor.u32 %v292, 2147483648
  %v306 = vmul.f32 %v305, 1.442695
  %v307 = vpow.pop %v306
  %v308 = vadd.f32 %v307, 1.0
  %v309 = vrcp.pop %v308
  %v310 = vmul.f32 1.0, %v309
  %v311 = vtanh.pop %v241
  %v312 = vmul.f32 %v304, 0.0
  %314 = vrot.lane.b32.xlu0 %v311, 64
  %v315 = vpop.permute.xlu0 %314
  %v317 = vmul.f32 %v298, %v315
  %319 = vrot.lane.b32.xlu0 %v317, 32
  %v320 = vpop.permute.xlu0 %319
  %v322 = vadd.f32 %v312, %v320
  %v323 = vtanh.pop %v322
  %325 = vrot.lane.b32.xlu0 %v323, 64
  %v326 = vpop.permute.xlu0 %325
  %v328 = vmul.f32 %v310, %v326
  %v329 = vpack.c.bf16 %v328, %v328
  %331 = vrot.lane.b32.xlu0 %v329, 32
  %v332 = vpop.permute.xlu0 %331
  %v334 = vsel %vm95, %v332, 0
  %336 = vmatprep.subr.bf16.mxu0 0
  %337 = vmatpush1.bf16.msra.mxu0 %v91
  %338 = vmatprep.subr.bf16.mxu0 0
  %339 = vmatpush1.bf16.msra.mxu0 %v92
  %340 = vmatprep.subr.bf16.mxu0 0
  %341 = vmatpush1.bf16.msra.mxu0 0
  %342 = vmatprep.subr.bf16.mxu0 0
  %343 = vmatpush1.bf16.msra.mxu0 0
  %344 = vmatprep.subr.bf16.mxu0 0
  %345 = vmatpush1.bf16.msra.mxu0 0
  %346 = vmatprep.subr.bf16.mxu0 0
  %347 = vmatpush1.bf16.msra.mxu0 0
  %348 = vmatprep.subr.bf16.mxu0 0
  %349 = vmatpush1.bf16.msra.mxu0 0
  %350 = vmatprep.subr.bf16.mxu0 0
  %351 = vmatpush1.bf16.msra.mxu0 0
  %352 = vmatprep.subr.bf16.mxu0 0
  %353 = vmatpush1.bf16.msra.mxu0 0
  %354 = vmatprep.subr.bf16.mxu0 0
  %355 = vmatpush1.bf16.msra.mxu0 0
  %356 = vmatprep.subr.bf16.mxu0 0
  %357 = vmatpush1.bf16.msra.mxu0 0
  %358 = vmatprep.subr.bf16.mxu0 0
  %359 = vmatpush1.bf16.msra.mxu0 0
  %360 = vmatprep.subr.bf16.mxu0 0
  %361 = vmatpush1.bf16.msra.mxu0 0
  %362 = vmatprep.subr.bf16.mxu0 0
  %363 = vmatpush1.bf16.msra.mxu0 0
  %364 = vmatprep.subr.bf16.mxu0 0
  %365 = vmatpush1.bf16.msra.mxu0 0
  %366 = vmatprep.subr.bf16.mxu0 0
  %367 = vmatpush1.bf16.msra.mxu0 0
  %368 = vmatprep.mubr.bf16.mxu0 0
  %369 = vmatmul.mubr.bf16.gmra.mrb[0].mxu0 %v334
  %v370 = vpop.f32.mrb[0].mxu0
  %v371 = vadd.f32 0.0, %v370
  %v372 = vpop.f32.mrb[0].mxu0
  %v373 = vpop.f32.mrb[0].mxu0
  %v374 = vpop.f32.mrb[0].mxu0
  %375 = vdwg.mxu0
  %v377 = vrot.slane %v371, 6
  %v379 = vadd.f32 %v77, %v377
  %380 = vmatprep.subr.bf16.mxu0 0
  %381 = vmatpush1.bf16.msra.mxu0 %v141
  %382 = vmatprep.subr.bf16.mxu0 0
  %383 = vmatpush1.bf16.msra.mxu0 %v143
  %384 = vmatprep.subr.bf16.mxu0 0
  %385 = vmatpush1.bf16.msra.mxu0 0
  %386 = vmatprep.subr.bf16.mxu0 0
  %387 = vmatpush1.bf16.msra.mxu0 0
  %388 = vmatprep.subr.bf16.mxu0 0
  %389 = vmatpush1.bf16.msra.mxu0 0
  %390 = vmatprep.subr.bf16.mxu0 0
  %391 = vmatpush1.bf16.msra.mxu0 0
  %392 = vmatprep.subr.bf16.mxu0 0
  %393 = vmatpush1.bf16.msra.mxu0 0
  %394 = vmatprep.subr.bf16.mxu0 0
  %395 = vmatpush1.bf16.msra.mxu0 0
  %396 = vmatprep.subr.bf16.mxu0 0
  %397 = vmatpush1.bf16.msra.mxu0 0
  %398 = vmatprep.subr.bf16.mxu0 0
  %399 = vmatpush1.bf16.msra.mxu0 0
  %400 = vmatprep.subr.bf16.mxu0 0
  %401 = vmatpush1.bf16.msra.mxu0 0
  %402 = vmatprep.subr.bf16.mxu0 0
  %403 = vmatpush1.bf16.msra.mxu0 0
  %404 = vmatprep.subr.bf16.mxu0 0
  %405 = vmatpush1.bf16.msra.mxu0 0
  %406 = vmatprep.subr.bf16.mxu0 0
  %407 = vmatpush1.bf16.msra.mxu0 0
  %408 = vmatprep.subr.bf16.mxu0 0
  %409 = vmatpush1.bf16.msra.mxu0 0
  %410 = vmatprep.subr.bf16.mxu0 0
  %411 = vmatpush1.bf16.msra.mxu0 0
  %412 = vmatprep.mubr.bf16.mxu0 0
  %413 = vmatmul.mubr.bf16.gmra.mrb[0].mxu0 %v334
  %v414 = vpop.f32.mrb[0].mxu0
  %v415 = vadd.f32 0.0, %v414
  %v416 = vpop.f32.mrb[0].mxu0
  %v417 = vpop.f32.mrb[0].mxu0
  %v418 = vpop.f32.mrb[0].mxu0
  %419 = vdwg.mxu0
  %v421 = vrot.slane %v415, 6
  %422 = vrot.lane.b32.xlu0 %v421, 32
  %v423 = vpop.permute.xlu0 %422
  %v425 = vadd.f32 %v77, %v423
  %426 = vmatprep.subr.bf16.mxu0 0
  %427 = vmatpush1.bf16.msra.mxu0 %v192
  %428 = vmatprep.subr.bf16.mxu0 0
  %429 = vmatpush1.bf16.msra.mxu0 %v194
  %430 = vmatprep.subr.bf16.mxu0 0
  %431 = vmatpush1.bf16.msra.mxu0 0
  %432 = vmatprep.subr.bf16.mxu0 0
  %433 = vmatpush1.bf16.msra.mxu0 0
  %434 = vmatprep.subr.bf16.mxu0 0
  %435 = vmatpush1.bf16.msra.mxu0 0
  %436 = vmatprep.subr.bf16.mxu0 0
  %437 = vmatpush1.bf16.msra.mxu0 0
  %438 = vmatprep.subr.bf16.mxu0 0
  %439 = vmatpush1.bf16.msra.mxu0 0
  %440 = vmatprep.subr.bf16.mxu0 0
  %441 = vmatpush1.bf16.msra.mxu0 0
  %442 = vmatprep.subr.bf16.mxu0 0
  %443 = vmatpush1.bf16.msra.mxu0 0
  %444 = vmatprep.subr.bf16.mxu0 0
  %445 = vmatpush1.bf16.msra.mxu0 0
  %446 = vmatprep.subr.bf16.mxu0 0
  %447 = vmatpush1.bf16.msra.mxu0 0
  %448 = vmatprep.subr.bf16.mxu0 0
  %449 = vmatpush1.bf16.msra.mxu0 0
  %450 = vmatprep.subr.bf16.mxu0 0
  %451 = vmatpush1.bf16.msra.mxu0 0
  %452 = vmatprep.subr.bf16.mxu0 0
  %453 = vmatpush1.bf16.msra.mxu0 0
  %454 = vmatprep.subr.bf16.mxu0 0
  %455 = vmatpush1.bf16.msra.mxu0 0
  %456 = vmatprep.subr.bf16.mxu0 0
  %457 = vmatpush1.bf16.msra.mxu0 0
  %458 = vmatprep.mubr.bf16.mxu0 0
  %459 = vmatmul.mubr.bf16.gmra.mrb[0].mxu0 %v334
  %v460 = vpop.f32.mrb[0].mxu0
  %v461 = vadd.f32 0.0, %v460
  %v462 = vpop.f32.mrb[0].mxu0
  %v463 = vpop.f32.mrb[0].mxu0
  %v464 = vpop.f32.mrb[0].mxu0
  %465 = vdwg.mxu0
  %v467 = vrot.slane %v461, 6
  %468 = vrot.lane.b32.xlu0 %v467, 64
  %v469 = vpop.permute.xlu0 %468
  %v471 = vadd.f32 %v77, %v469
  %472 = vmatprep.subr.bf16.mxu0 0
  %473 = vmatpush1.bf16.msra.mxu0 %v243
  %474 = vmatprep.subr.bf16.mxu0 0
  %475 = vmatpush1.bf16.msra.mxu0 %v245
  %476 = vmatprep.subr.bf16.mxu0 0
  %477 = vmatpush1.bf16.msra.mxu0 0
  %478 = vmatprep.subr.bf16.mxu0 0
  %479 = vmatpush1.bf16.msra.mxu0 0
  %480 = vmatprep.subr.bf16.mxu0 0
  %481 = vmatpush1.bf16.msra.mxu0 0
  %482 = vmatprep.subr.bf16.mxu0 0
  %483 = vmatpush1.bf16.msra.mxu0 0
  %484 = vmatprep.subr.bf16.mxu0 0
  %485 = vmatpush1.bf16.msra.mxu0 0
  %486 = vmatprep.subr.bf16.mxu0 0
  %487 = vmatpush1.bf16.msra.mxu0 0
  %488 = vmatprep.subr.bf16.mxu0 0
  %489 = vmatpush1.bf16.msra.mxu0 0
  %490 = vmatprep.subr.bf16.mxu0 0
  %491 = vmatpush1.bf16.msra.mxu0 0
  %492 = vmatprep.subr.bf16.mxu0 0
  %493 = vmatpush1.bf16.msra.mxu0 0
  %494 = vmatprep.subr.bf16.mxu0 0
  %495 = vmatpush1.bf16.msra.mxu0 0
  %496 = vmatprep.subr.bf16.mxu0 0
  %497 = vmatpush1.bf16.msra.mxu0 0
  %498 = vmatprep.subr.bf16.mxu0 0
  %499 = vmatpush1.bf16.msra.mxu0 0
  %500 = vmatprep.subr.bf16.mxu0 0
  %501 = vmatpush1.bf16.msra.mxu0 0
  %502 = vmatprep.subr.bf16.mxu0 0
  %503 = vmatpush1.bf16.msra.mxu0 0
  %504 = vmatprep.mubr.bf16.mxu0 0
  %505 = vmatmul.mubr.bf16.gmra.mrb[0].mxu0 %v334
  %v506 = vpop.f32.mrb[0].mxu0
  %v507 = vadd.f32 0.0, %v506
  %v508 = vpop.f32.mrb[0].mxu0
  %v509 = vpop.f32.mrb[0].mxu0
  %v510 = vpop.f32.mrb[0].mxu0
  %511 = vdwg.mxu0
  %v513 = vrot.slane %v507, 6
  %514 = vrot.lane.b32.xlu0 %v513, 96
  %v515 = vpop.permute.xlu0 %514
  %v517 = vadd.f32 %v77, %v515
  %v518 = vxor.u32 %v379, 2147483648
  %v519 = vmul.f32 %v518, 1.442695
  %v520 = vpow.pop %v519
  %v521 = vadd.f32 %v520, 1.0
  %v522 = vrcp.pop %v521
  %v523 = vmul.f32 1.0, %v522
  %v524 = vxor.u32 %v425, 2147483648
  %v525 = vmul.f32 %v524, 1.442695
  %v526 = vpow.pop %v525
  %v527 = vadd.f32 %v526, 1.0
  %v528 = vrcp.pop %v527
  %v529 = vmul.f32 1.0, %v528
  %v530 = vxor.u32 %v517, 2147483648
  %v531 = vmul.f32 %v530, 1.442695
  %v532 = vpow.pop %v531
  %v533 = vadd.f32 %v532, 1.0
  %v534 = vrcp.pop %v533
  %v535 = vmul.f32 1.0, %v534
  %v536 = vtanh.pop %v471
  %v538 = vrot.slane %v322, 6
  %v540 = vmul.f32 %v529, %v538
  %542 = vrot.lane.b32.xlu0 %v536, 64
  %v543 = vpop.permute.xlu0 %542
  %v545 = vmul.f32 %v523, %v543
  %547 = vrot.lane.b32.xlu0 %v545, 32
  %v548 = vpop.permute.xlu0 %547
  %v550 = vadd.f32 %v540, %v548
  %v551 = vtanh.pop %v550
  %553 = vrot.lane.b32.xlu0 %v551, 64
  %v554 = vpop.permute.xlu0 %553
  %v556 = vmul.f32 %v535, %v554
  %v557 = vpack.c.bf16 %v556, %v556
  %v559 = vrot.slane %v557, 1
  %560 = vrot.lane.b32.xlu0 %v559, 32
  %v561 = vpop.permute.xlu0 %560
  %v563 = vsel %vm95, %v561, 0
  %565 = vmatprep.subr.bf16.mxu0 0
  %566 = vmatpush1.bf16.msra.mxu0 %v91
  %567 = vmatprep.subr.bf16.mxu0 0
  %568 = vmatpush1.bf16.msra.mxu0 %v92
  %569 = vmatprep.subr.bf16.mxu0 0
  %570 = vmatpush1.bf16.msra.mxu0 0
  %571 = vmatprep.subr.bf16.mxu0 0
  %572 = vmatpush1.bf16.msra.mxu0 0
  %573 = vmatprep.subr.bf16.mxu0 0
  %574 = vmatpush1.bf16.msra.mxu0 0
  %575 = vmatprep.subr.bf16.mxu0 0
  %576 = vmatpush1.bf16.msra.mxu0 0
  %577 = vmatprep.subr.bf16.mxu0 0
  %578 = vmatpush1.bf16.msra.mxu0 0
  %579 = vmatprep.subr.bf16.mxu0 0
  %580 = vmatpush1.bf16.msra.mxu0 0
  %581 = vmatprep.subr.bf16.mxu0 0
  %582 = vmatpush1.bf16.msra.mxu0 0
  %583 = vmatprep.subr.bf16.mxu0 0
  %584 = vmatpush1.bf16.msra.mxu0 0
  %585 = vmatprep.subr.bf16.mxu0 0
  %586 = vmatpush1.bf16.msra.mxu0 0
  %587 = vmatprep.subr.bf16.mxu0 0
  %588 = vmatpush1.bf16.msra.mxu0 0
  %589 = vmatprep.subr.bf16.mxu0 0
  %590 = vmatpush1.bf16.msra.mxu0 0
  %591 = vmatprep.subr.bf16.mxu0 0
  %592 = vmatpush1.bf16.msra.mxu0 0
  %593 = vmatprep.subr.bf16.mxu0 0
  %594 = vmatpush1.bf16.msra.mxu0 0
  %595 = vmatprep.subr.bf16.mxu0 0
  %596 = vmatpush1.bf16.msra.mxu0 0
  %597 = vmatprep.mubr.bf16.mxu0 0
  %598 = vmatmul.mubr.bf16.gmra.mrb[0].mxu0 %v563
  %v599 = vpop.f32.mrb[0].mxu0
  %v600 = vadd.f32 0.0, %v599
  %v601 = vpop.f32.mrb[0].mxu0
  %v602 = vpop.f32.mrb[0].mxu0
  %v603 = vpop.f32.mrb[0].mxu0
  %604 = vdwg.mxu0
  %v606 = vrot.slane %v600, 4
  %v608 = vadd.f32 %v77, %v606
  %609 = vmatprep.subr.bf16.mxu0 0
  %610 = vmatpush1.bf16.msra.mxu0 %v141
  %611 = vmatprep.subr.bf16.mxu0 0
  %612 = vmatpush1.bf16.msra.mxu0 %v143
  %613 = vmatprep.subr.bf16.mxu0 0
  %614 = vmatpush1.bf16.msra.mxu0 0
  %615 = vmatprep.subr.bf16.mxu0 0
  %616 = vmatpush1.bf16.msra.mxu0 0
  %617 = vmatprep.subr.bf16.mxu0 0
  %618 = vmatpush1.bf16.msra.mxu0 0
  %619 = vmatprep.subr.bf16.mxu0 0
  %620 = vmatpush1.bf16.msra.mxu0 0
  %621 = vmatprep.subr.bf16.mxu0 0
  %622 = vmatpush1.bf16.msra.mxu0 0
  %623 = vmatprep.subr.bf16.mxu0 0
  %624 = vmatpush1.bf16.msra.mxu0 0
  %625 = vmatprep.subr.bf16.mxu0 0
  %626 = vmatpush1.bf16.msra.mxu0 0
  %627 = vmatprep.subr.bf16.mxu0 0
  %628 = vmatpush1.bf16.msra.mxu0 0
  %629 = vmatprep.subr.bf16.mxu0 0
  %630 = vmatpush1.bf16.msra.mxu0 0
  %631 = vmatprep.subr.bf16.mxu0 0
  %632 = vmatpush1.bf16.msra.mxu0 0
  %633 = vmatprep.subr.bf16.mxu0 0
  %634 = vmatpush1.bf16.msra.mxu0 0
  %635 = vmatprep.subr.bf16.mxu0 0
  %636 = vmatpush1.bf16.msra.mxu0 0
  %637 = vmatprep.subr.bf16.mxu0 0
  %638 = vmatpush1.bf16.msra.mxu0 0
  %639 = vmatprep.subr.bf16.mxu0 0
  %640 = vmatpush1.bf16.msra.mxu0 0
  %641 = vmatprep.mubr.bf16.mxu0 0
  %642 = vmatmul.mubr.bf16.gmra.mrb[0].mxu0 %v563
  %v643 = vpop.f32.mrb[0].mxu0
  %v644 = vadd.f32 0.0, %v643
  %v645 = vpop.f32.mrb[0].mxu0
  %v646 = vpop.f32.mrb[0].mxu0
  %v647 = vpop.f32.mrb[0].mxu0
  %648 = vdwg.mxu0
  %v650 = vrot.slane %v644, 4
  %651 = vrot.lane.b32.xlu0 %v650, 32
  %v652 = vpop.permute.xlu0 %651
  %v654 = vadd.f32 %v77, %v652
  %655 = vmatprep.subr.bf16.mxu0 0
  %656 = vmatpush1.bf16.msra.mxu0 %v192
  %657 = vmatprep.subr.bf16.mxu0 0
  %658 = vmatpush1.bf16.msra.mxu0 %v194
  %659 = vmatprep.subr.bf16.mxu0 0
  %660 = vmatpush1.bf16.msra.mxu0 0
  %661 = vmatprep.subr.bf16.mxu0 0
  %662 = vmatpush1.bf16.msra.mxu0 0
  %663 = vmatprep.subr.bf16.mxu0 0
  %664 = vmatpush1.bf16.msra.mxu0 0
  %665 = vmatprep.subr.bf16.mxu0 0
  %666 = vmatpush1.bf16.msra.mxu0 0
  %667 = vmatprep.subr.bf16.mxu0 0
  %668 = vmatpush1.bf16.msra.mxu0 0
  %669 = vmatprep.subr.bf16.mxu0 0
  %670 = vmatpush1.bf16.msra.mxu0 0
  %671 = vmatprep.subr.bf16.mxu0 0
  %672 = vmatpush1.bf16.msra.mxu0 0
  %673 = vmatprep.subr.bf16.mxu0 0
  %674 = vmatpush1.bf16.msra.mxu0 0
  %675 = vmatprep.subr.bf16.mxu0 0
  %676 = vmatpush1.bf16.msra.mxu0 0
  %677 = vmatprep.subr.bf16.mxu0 0
  %678 = vmatpush1.bf16.msra.mxu0 0
  %679 = vmatprep.subr.bf16.mxu0 0
  %680 = vmatpush1.bf16.msra.mxu0 0
  %681 = vmatprep.subr.bf16.mxu0 0
  %682 = vmatpush1.bf16.msra.mxu0 0
  %683 = vmatprep.subr.bf16.mxu0 0
  %684 = vmatpush1.bf16.msra.mxu0 0
  %685 = vmatprep.subr.bf16.mxu0 0
  %686 = vmatpush1.bf16.msra.mxu0 0
  %687 = vmatprep.mubr.bf16.mxu0 0
  %688 = vmatmul.mubr.bf16.gmra.mrb[0].mxu0 %v563
  %v689 = vpop.f32.mrb[0].mxu0
  %v690 = vadd.f32 0.0, %v689
  %v691 = vpop.f32.mrb[0].mxu0
  %v692 = vpop.f32.mrb[0].mxu0
  %v693 = vpop.f32.mrb[0].mxu0
  %694 = vdwg.mxu0
  %v696 = vrot.slane %v690, 4
  %697 = vrot.lane.b32.xlu0 %v696, 64
  %v698 = vpop.permute.xlu0 %697
  %v700 = vadd.f32 %v77, %v698
  %701 = vmatprep.subr.bf16.mxu0 0
  %702 = vmatpush1.bf16.msra.mxu0 %v243
  %703 = vmatprep.subr.bf16.mxu0 0
  %704 = vmatpush1.bf16.msra.mxu0 %v245
  %705 = vmatprep.subr.bf16.mxu0 0
  %706 = vmatpush1.bf16.msra.mxu0 0
  %707 = vmatprep.subr.bf16.mxu0 0
  %708 = vmatpush1.bf16.msra.mxu0 0
  %709 = vmatprep.subr.bf16.mxu0 0
  %710 = vmatpush1.bf16.msra.mxu0 0
  %711 = vmatprep.subr.bf16.mxu0 0
  %712 = vmatpush1.bf16.msra.mxu0 0
  %713 = vmatprep.subr.bf16.mxu0 0
  %714 = vmatpush1.bf16.msra.mxu0 0
  %715 = vmatprep.subr.bf16.mxu0 0
  %716 = vmatpush1.bf16.msra.mxu0 0
  %717 = vmatprep.subr.bf16.mxu0 0
  %718 = vmatpush1.bf16.msra.mxu0 0
  %719 = vmatprep.subr.bf16.mxu0 0
  %720 = vmatpush1.bf16.msra.mxu0 0
  %721 = vmatprep.subr.bf16.mxu0 0
  %722 = vmatpush1.bf16.msra.mxu0 0
  %723 = vmatprep.subr.bf16.mxu0 0
  %724 = vmatpush1.bf16.msra.mxu0 0
  %725 = vmatprep.subr.bf16.mxu0 0
  %726 = vmatpush1.bf16.msra.mxu0 0
  %727 = vmatprep.subr.bf16.mxu0 0
  %728 = vmatpush1.bf16.msra.mxu0 0
  %729 = vmatprep.subr.bf16.mxu0 0
  %730 = vmatpush1.bf16.msra.mxu0 0
  %731 = vmatprep.subr.bf16.mxu0 0
  %732 = vmatpush1.bf16.msra.mxu0 0
  %733 = vmatprep.mubr.bf16.mxu0 0
  %734 = vmatmul.mubr.bf16.gmra.mrb[0].mxu0 %v563
  %v735 = vpop.f32.mrb[0].mxu0
  %v736 = vadd.f32 0.0, %v735
  %v737 = vpop.f32.mrb[0].mxu0
  %v738 = vpop.f32.mrb[0].mxu0
  %v739 = vpop.f32.mrb[0].mxu0
  %740 = vdwg.mxu0
  %v742 = vrot.slane %v736, 4
  %743 = vrot.lane.b32.xlu0 %v742, 96
  %v744 = vpop.permute.xlu0 %743
  %v746 = vadd.f32 %v77, %v744
  %v747 = vxor.u32 %v608, 2147483648
  %v748 = vmul.f32 %v747, 1.442695
  %v749 = vpow.pop %v748
  %v750 = vadd.f32 %v749, 1.0
  %v751 = vrcp.pop %v750
  %v752 = vmul.f32 1.0, %v751
  %v753 = vxor.u32 %v654, 2147483648
  %v754 = vmul.f32 %v753, 1.442695
  %v755 = vpow.pop %v754
  %v756 = vadd.f32 %v755, 1.0
  %v757 = vrcp.pop %v756
  %v758 = vmul.f32 1.0, %v757
  %v759 = vxor.u32 %v746, 2147483648
  %v760 = vmul.f32 %v759, 1.442695
  %v761 = vpow.pop %v760
  %v762 = vadd.f32 %v761, 1.0
  %v763 = vrcp.pop %v762
  %v764 = vmul.f32 1.0, %v763
  %v765 = vtanh.pop %v700
  %v767 = vrot.slane %v550, 6
  %v769 = vmul.f32 %v758, %v767
  %771 = vrot.lane.b32.xlu0 %v765, 64
  %v772 = vpop.permute.xlu0 %771
  %v774 = vmul.f32 %v752, %v772
  %776 = vrot.lane.b32.xlu0 %v774, 32
  %v777 = vpop.permute.xlu0 %776
  %v779 = vadd.f32 %v769, %v777
  %v780 = vtanh.pop %v779
  %782 = vrot.lane.b32.xlu0 %v780, 64
  %v783 = vpop.permute.xlu0 %782
  %v785 = vmul.f32 %v764, %v783
  %v786 = vpack.c.bf16 %v785, %v785
  %v788 = vrot.slane %v786, 2
  %789 = vrot.lane.b32.xlu0 %v788, 32
  %v790 = vpop.permute.xlu0 %789
  %v792 = vsel %vm95, %v790, 0
  %794 = vmatprep.subr.bf16.mxu0 0
  %795 = vmatpush1.bf16.msra.mxu0 %v91
  %796 = vmatprep.subr.bf16.mxu0 0
  %797 = vmatpush1.bf16.msra.mxu0 %v92
  %798 = vmatprep.subr.bf16.mxu0 0
  %799 = vmatpush1.bf16.msra.mxu0 0
  %800 = vmatprep.subr.bf16.mxu0 0
  %801 = vmatpush1.bf16.msra.mxu0 0
  %802 = vmatprep.subr.bf16.mxu0 0
  %803 = vmatpush1.bf16.msra.mxu0 0
  %804 = vmatprep.subr.bf16.mxu0 0
  %805 = vmatpush1.bf16.msra.mxu0 0
  %806 = vmatprep.subr.bf16.mxu0 0
  %807 = vmatpush1.bf16.msra.mxu0 0
  %808 = vmatprep.subr.bf16.mxu0 0
  %809 = vmatpush1.bf16.msra.mxu0 0
  %810 = vmatprep.subr.bf16.mxu0 0
  %811 = vmatpush1.bf16.msra.mxu0 0
  %812 = vmatprep.subr.bf16.mxu0 0
  %813 = vmatpush1.bf16.msra.mxu0 0
  %814 = vmatprep.subr.bf16.mxu0 0
  %815 = vmatpush1.bf16.msra.mxu0 0
  %816 = vmatprep.subr.bf16.mxu0 0
  %817 = vmatpush1.bf16.msra.mxu0 0
  %818 = vmatprep.subr.bf16.mxu0 0
  %819 = vmatpush1.bf16.msra.mxu0 0
  %820 = vmatprep.subr.bf16.mxu0 0
  %821 = vmatpush1.bf16.msra.mxu0 0
  %822 = vmatprep.subr.bf16.mxu0 0
  %823 = vmatpush1.bf16.msra.mxu0 0
  %824 = vmatprep.subr.bf16.mxu0 0
  %825 = vmatpush1.bf16.msra.mxu0 0
  %826 = vmatprep.mubr.bf16.mxu0 0
  %827 = vmatmul.mubr.bf16.gmra.mrb[0].mxu0 %v792
  %v828 = vpop.f32.mrb[0].mxu0
  %v829 = vadd.f32 0.0, %v828
  %v830 = vpop.f32.mrb[0].mxu0
  %v831 = vpop.f32.mrb[0].mxu0
  %v832 = vpop.f32.mrb[0].mxu0
  %833 = vdwg.mxu0
  %v835 = vrot.slane %v829, 2
  %v837 = vadd.f32 %v77, %v835
  %838 = vmatprep.subr.bf16.mxu0 0
  %839 = vmatpush1.bf16.msra.mxu0 %v141
  %840 = vmatprep.subr.bf16.mxu0 0
  %841 = vmatpush1.bf16.msra.mxu0 %v143
  %842 = vmatprep.subr.bf16.mxu0 0
  %843 = vmatpush1.bf16.msra.mxu0 0
  %844 = vmatprep.subr.bf16.mxu0 0
  %845 = vmatpush1.bf16.msra.mxu0 0
  %846 = vmatprep.subr.bf16.mxu0 0
  %847 = vmatpush1.bf16.msra.mxu0 0
  %848 = vmatprep.subr.bf16.mxu0 0
  %849 = vmatpush1.bf16.msra.mxu0 0
  %850 = vmatprep.subr.bf16.mxu0 0
  %851 = vmatpush1.bf16.msra.mxu0 0
  %852 = vmatprep.subr.bf16.mxu0 0
  %853 = vmatpush1.bf16.msra.mxu0 0
  %854 = vmatprep.subr.bf16.mxu0 0
  %855 = vmatpush1.bf16.msra.mxu0 0
  %856 = vmatprep.subr.bf16.mxu0 0
  %857 = vmatpush1.bf16.msra.mxu0 0
  %858 = vmatprep.subr.bf16.mxu0 0
  %859 = vmatpush1.bf16.msra.mxu0 0
  %860 = vmatprep.subr.bf16.mxu0 0
  %861 = vmatpush1.bf16.msra.mxu0 0
  %862 = vmatprep.subr.bf16.mxu0 0
  %863 = vmatpush1.bf16.msra.mxu0 0
  %864 = vmatprep.subr.bf16.mxu0 0
  %865 = vmatpush1.bf16.msra.mxu0 0
  %866 = vmatprep.subr.bf16.mxu0 0
  %867 = vmatpush1.bf16.msra.mxu0 0
  %868 = vmatprep.subr.bf16.mxu0 0
  %869 = vmatpush1.bf16.msra.mxu0 0
  %870 = vmatprep.mubr.bf16.mxu0 0
  %871 = vmatmul.mubr.bf16.gmra.mrb[0].mxu0 %v792
  %v872 = vpop.f32.mrb[0].mxu0
  %v873 = vadd.f32 0.0, %v872
  %v874 = vpop.f32.mrb[0].mxu0
  %v875 = vpop.f32.mrb[0].mxu0
  %v876 = vpop.f32.mrb[0].mxu0
  %877 = vdwg.mxu0
  %v879 = vrot.slane %v873, 2
  %880 = vrot.lane.b32.xlu0 %v879, 32
  %v881 = vpop.permute.xlu0 %880
  %v883 = vadd.f32 %v77, %v881
  %884 = vmatprep.subr.bf16.mxu0 0
  %885 = vmatpush1.bf16.msra.mxu0 %v192
  %886 = vmatprep.subr.bf16.mxu0 0
  %887 = vmatpush1.bf16.msra.mxu0 %v194
  %888 = vmatprep.subr.bf16.mxu0 0
  %889 = vmatpush1.bf16.msra.mxu0 0
  %890 = vmatprep.subr.bf16.mxu0 0
  %891 = vmatpush1.bf16.msra.mxu0 0
  %892 = vmatprep.subr.bf16.mxu0 0
  %893 = vmatpush1.bf16.msra.mxu0 0
  %894 = vmatprep.subr.bf16.mxu0 0
  %895 = vmatpush1.bf16.msra.mxu0 0
  %896 = vmatprep.subr.bf16.mxu0 0
  %897 = vmatpush1.bf16.msra.mxu0 0
  %898 = vmatprep.subr.bf16.mxu0 0
  %899 = vmatpush1.bf16.msra.mxu0 0
  %900 = vmatprep.subr.bf16.mxu0 0
  %901 = vmatpush1.bf16.msra.mxu0 0
  %902 = vmatprep.subr.bf16.mxu0 0
  %903 = vmatpush1.bf16.msra.mxu0 0
  %904 = vmatprep.subr.bf16.mxu0 0
  %905 = vmatpush1.bf16.msra.mxu0 0
  %906 = vmatprep.subr.bf16.mxu0 0
  %907 = vmatpush1.bf16.msra.mxu0 0
  %908 = vmatprep.subr.bf16.mxu0 0
  %909 = vmatpush1.bf16.msra.mxu0 0
  %910 = vmatprep.subr.bf16.mxu0 0
  %911 = vmatpush1.bf16.msra.mxu0 0
  %912 = vmatprep.subr.bf16.mxu0 0
  %913 = vmatpush1.bf16.msra.mxu0 0
  %914 = vmatprep.subr.bf16.mxu0 0
  %915 = vmatpush1.bf16.msra.mxu0 0
  %916 = vmatprep.mubr.bf16.mxu0 0
  %917 = vmatmul.mubr.bf16.gmra.mrb[0].mxu0 %v792
  %v918 = vpop.f32.mrb[0].mxu0
  %v919 = vadd.f32 0.0, %v918
  %v920 = vpop.f32.mrb[0].mxu0
  %v921 = vpop.f32.mrb[0].mxu0
  %v922 = vpop.f32.mrb[0].mxu0
  %923 = vdwg.mxu0
  %v925 = vrot.slane %v919, 2
  %926 = vrot.lane.b32.xlu0 %v925, 64
  %v927 = vpop.permute.xlu0 %926
  %v929 = vadd.f32 %v77, %v927
  %930 = vmatprep.subr.bf16.mxu0 0
  %931 = vmatpush1.bf16.msra.mxu0 %v243
  %932 = vmatprep.subr.bf16.mxu0 0
  %933 = vmatpush1.bf16.msra.mxu0 %v245
  %934 = vmatprep.subr.bf16.mxu0 0
  %935 = vmatpush1.bf16.msra.mxu0 0
  %936 = vmatprep.subr.bf16.mxu0 0
  %937 = vmatpush1.bf16.msra.mxu0 0
  %938 = vmatprep.subr.bf16.mxu0 0
  %939 = vmatpush1.bf16.msra.mxu0 0
  %940 = vmatprep.subr.bf16.mxu0 0
  %941 = vmatpush1.bf16.msra.mxu0 0
  %942 = vmatprep.subr.bf16.mxu0 0
  %943 = vmatpush1.bf16.msra.mxu0 0
  %944 = vmatprep.subr.bf16.mxu0 0
  %945 = vmatpush1.bf16.msra.mxu0 0
  %946 = vmatprep.subr.bf16.mxu0 0
  %947 = vmatpush1.bf16.msra.mxu0 0
  %948 = vmatprep.subr.bf16.mxu0 0
  %949 = vmatpush1.bf16.msra.mxu0 0
  %950 = vmatprep.subr.bf16.mxu0 0
  %951 = vmatpush1.bf16.msra.mxu0 0
  %952 = vmatprep.subr.bf16.mxu0 0
  %953 = vmatpush1.bf16.msra.mxu0 0
  %954 = vmatprep.subr.bf16.mxu0 0
  %955 = vmatpush1.bf16.msra.mxu0 0
  %956 = vmatprep.subr.bf16.mxu0 0
  %957 = vmatpush1.bf16.msra.mxu0 0
  %958 = vmatprep.subr.bf16.mxu0 0
  %959 = vmatpush1.bf16.msra.mxu0 0
  %960 = vmatprep.subr.bf16.mxu0 0
  %961 = vmatpush1.bf16.msra.mxu0 0
  %962 = vmatprep.mubr.bf16.mxu0 0
  %963 = vmatmul.mubr.bf16.gmra.mrb[0].mxu0 %v792
  %v964 = vpop.f32.mrb[0].mxu0
  %v965 = vadd.f32 0.0, %v964
  %v966 = vpop.f32.mrb[0].mxu0
  %v967 = vpop.f32.mrb[0].mxu0
  %v968 = vpop.f32.mrb[0].mxu0
  %969 = vdwg.mxu0
  %v971 = vrot.slane %v965, 2
  %972 = vrot.lane.b32.xlu0 %v971, 96
  %v973 = vpop.permute.xlu0 %972
  %v975 = vadd.f32 %v77, %v973
  %v976 = vxor.u32 %v837, 2147483648
  %v977 = vmul.f32 %v976, 1.442695
  %v978 = vpow.pop %v977
  %v979 = vadd.f32 %v978, 1.0
  %v980 = vrcp.pop %v979
  %v981 = vmul.f32 1.0, %v980
  %v982 = vxor.u32 %v883, 2147483648
  %v983 = vmul.f32 %v982, 1.442695
  %v984 = vpow.pop %v983
  %v985 = vadd.f32 %v984, 1.0
  %v986 = vrcp.pop %v985
  %v987 = vmul.f32 1.0, %v986
  %v988 = vxor.u32 %v975, 2147483648
  %v989 = vmul.f32 %v988, 1.442695
  %v990 = vpow.pop %v989
  %v991 = vadd.f32 %v990, 1.0
  %v992 = vrcp.pop %v991
  %v993 = vmul.f32 1.0, %v992
  %v994 = vtanh.pop %v929
  %v996 = vrot.slane %v779, 6
  %v998 = vmul.f32 %v987, %v996
  %1000 = vrot.lane.b32.xlu0 %v994, 64
  %v1001 = vpop.permute.xlu0 %1000
  %v1003 = vmul.f32 %v981, %v1001
  %1005 = vrot.lane.b32.xlu0 %v1003, 32
  %v1006 = vpop.permute.xlu0 %1005
  %v1008 = vadd.f32 %v998, %v1006
  %v1009 = vtanh.pop %v1008
  %1011 = vrot.lane.b32.xlu0 %v1009, 64
  %v1012 = vpop.permute.xlu0 %1011
  %v1014 = vmul.f32 %v993, %v1012
  %v1015 = vpack.c.bf16 %v1014, %v1014
  %v1017 = vrot.slane %v1015, 3
  %1018 = vrot.lane.b32.xlu0 %v1017, 32
  %v1019 = vpop.permute.xlu0 %1018
  %v1021 = vsel %vm95, %v1019, 0
  %1023 = vmatprep.subr.bf16.mxu0 0
  %1024 = vmatpush1.bf16.msra.mxu0 %v91
  %1025 = vmatprep.subr.bf16.mxu0 0
  %1026 = vmatpush1.bf16.msra.mxu0 %v92
  %1027 = vmatprep.subr.bf16.mxu0 0
  %1028 = vmatpush1.bf16.msra.mxu0 0
  %1029 = vmatprep.subr.bf16.mxu0 0
  %1030 = vmatpush1.bf16.msra.mxu0 0
  %1031 = vmatprep.subr.bf16.mxu0 0
  %1032 = vmatpush1.bf16.msra.mxu0 0
  %1033 = vmatprep.subr.bf16.mxu0 0
  %1034 = vmatpush1.bf16.msra.mxu0 0
  %1035 = vmatprep.subr.bf16.mxu0 0
  %1036 = vmatpush1.bf16.msra.mxu0 0
  %1037 = vmatprep.subr.bf16.mxu0 0
  %1038 = vmatpush1.bf16.msra.mxu0 0
  %1039 = vmatprep.subr.bf16.mxu0 0
  %1040 = vmatpush1.bf16.msra.mxu0 0
  %1041 = vmatprep.subr.bf16.mxu0 0
  %1042 = vmatpush1.bf16.msra.mxu0 0
  %1043 = vmatprep.subr.bf16.mxu0 0
  %1044 = vmatpush1.bf16.msra.mxu0 0
  %1045 = vmatprep.subr.bf16.mxu0 0
  %1046 = vmatpush1.bf16.msra.mxu0 0
  %1047 = vmatprep.subr.bf16.mxu0 0
  %1048 = vmatpush1.bf16.msra.mxu0 0
  %1049 = vmatprep.subr.bf16.mxu0 0
  %1050 = vmatpush1.bf16.msra.mxu0 0
  %1051 = vmatprep.subr.bf16.mxu0 0
  %1052 = vmatpush1.bf16.msra.mxu0 0
  %1053 = vmatprep.subr.bf16.mxu0 0
  %1054 = vmatpush1.bf16.msra.mxu0 0
  %1055 = vmatprep.mubr.bf16.mxu0 0
  %1056 = vmatmul.mubr.bf16.gmra.mrb[0].mxu0 %v1021
  %v1057 = vpop.f32.mrb[0].mxu0
  %v1058 = vadd.f32 0.0, %v1057
  %v1059 = vpop.f32.mrb[0].mxu0
  %v1060 = vpop.f32.mrb[0].mxu0
  %v1061 = vpop.f32.mrb[0].mxu0
  %1062 = vdwg.mxu0
  %v1063 = vadd.f32 %v80, %v1058
  %1064 = vmatprep.subr.bf16.mxu0 0
  %1065 = vmatpush1.bf16.msra.mxu0 %v141
  %1066 = vmatprep.subr.bf16.mxu0 0
  %1067 = vmatpush1.bf16.msra.mxu0 %v143
  %1068 = vmatprep.subr.bf16.mxu0 0
  %1069 = vmatpush1.bf16.msra.mxu0 0
  %1070 = vmatprep.subr.bf16.mxu0 0
  %1071 = vmatpush1.bf16.msra.mxu0 0
  %1072 = vmatprep.subr.bf16.mxu0 0
  %1073 = vmatpush1.bf16.msra.mxu0 0
  %1074 = vmatprep.subr.bf16.mxu0 0
  %1075 = vmatpush1.bf16.msra.mxu0 0
  %1076 = vmatprep.subr.bf16.mxu0 0
  %1077 = vmatpush1.bf16.msra.mxu0 0
  %1078 = vmatprep.subr.bf16.mxu0 0
  %1079 = vmatpush1.bf16.msra.mxu0 0
  %1080 = vmatprep.subr.bf16.mxu0 0
  %1081 = vmatpush1.bf16.msra.mxu0 0
  %1082 = vmatprep.subr.bf16.mxu0 0
  %1083 = vmatpush1.bf16.msra.mxu0 0
  %1084 = vmatprep.subr.bf16.mxu0 0
  %1085 = vmatpush1.bf16.msra.mxu0 0
  %1086 = vmatprep.subr.bf16.mxu0 0
  %1087 = vmatpush1.bf16.msra.mxu0 0
  %1088 = vmatprep.subr.bf16.mxu0 0
  %1089 = vmatpush1.bf16.msra.mxu0 0
  %1090 = vmatprep.subr.bf16.mxu0 0
  %1091 = vmatpush1.bf16.msra.mxu0 0
  %1092 = vmatprep.subr.bf16.mxu0 0
  %1093 = vmatpush1.bf16.msra.mxu0 0
  %1094 = vmatprep.subr.bf16.mxu0 0
  %1095 = vmatpush1.bf16.msra.mxu0 0
  %1096 = vmatprep.mubr.bf16.mxu0 0
  %1097 = vmatmul.mubr.bf16.gmra.mrb[0].mxu0 %v1021
  %v1098 = vpop.f32.mrb[0].mxu0
  %v1099 = vadd.f32 0.0, %v1098
  %v1100 = vpop.f32.mrb[0].mxu0
  %v1101 = vpop.f32.mrb[0].mxu0
  %v1102 = vpop.f32.mrb[0].mxu0
  %1103 = vdwg.mxu0
  %1105 = vrot.lane.b32.xlu0 %v1099, 32
  %v1106 = vpop.permute.xlu0 %1105
  %v1108 = vadd.f32 %v80, %v1106
  %1109 = vmatprep.subr.bf16.mxu0 0
  %1110 = vmatpush1.bf16.msra.mxu0 %v192
  %1111 = vmatprep.subr.bf16.mxu0 0
  %1112 = vmatpush1.bf16.msra.mxu0 %v194
  %1113 = vmatprep.subr.bf16.mxu0 0
  %1114 = vmatpush1.bf16.msra.mxu0 0
  %1115 = vmatprep.subr.bf16.mxu0 0
  %1116 = vmatpush1.bf16.msra.mxu0 0
  %1117 = vmatprep.subr.bf16.mxu0 0
  %1118 = vmatpush1.bf16.msra.mxu0 0
  %1119 = vmatprep.subr.bf16.mxu0 0
  %1120 = vmatpush1.bf16.msra.mxu0 0
  %1121 = vmatprep.subr.bf16.mxu0 0
  %1122 = vmatpush1.bf16.msra.mxu0 0
  %1123 = vmatprep.subr.bf16.mxu0 0
  %1124 = vmatpush1.bf16.msra.mxu0 0
  %1125 = vmatprep.subr.bf16.mxu0 0
  %1126 = vmatpush1.bf16.msra.mxu0 0
  %1127 = vmatprep.subr.bf16.mxu0 0
  %1128 = vmatpush1.bf16.msra.mxu0 0
  %1129 = vmatprep.subr.bf16.mxu0 0
  %1130 = vmatpush1.bf16.msra.mxu0 0
  %1131 = vmatprep.subr.bf16.mxu0 0
  %1132 = vmatpush1.bf16.msra.mxu0 0
  %1133 = vmatprep.subr.bf16.mxu0 0
  %1134 = vmatpush1.bf16.msra.mxu0 0
  %1135 = vmatprep.subr.bf16.mxu0 0
  %1136 = vmatpush1.bf16.msra.mxu0 0
  %1137 = vmatprep.subr.bf16.mxu0 0
  %1138 = vmatpush1.bf16.msra.mxu0 0
  %1139 = vmatprep.subr.bf16.mxu0 0
  %1140 = vmatpush1.bf16.msra.mxu0 0
  %1141 = vmatprep.mubr.bf16.mxu0 0
  %1142 = vmatmul.mubr.bf16.gmra.mrb[0].mxu0 %v1021
  %v1143 = vpop.f32.mrb[0].mxu0
  %v1144 = vadd.f32 0.0, %v1143
  %v1145 = vpop.f32.mrb[0].mxu0
  %v1146 = vpop.f32.mrb[0].mxu0
  %v1147 = vpop.f32.mrb[0].mxu0
  %1148 = vdwg.mxu0
  %1150 = vrot.lane.b32.xlu0 %v1144, 64
  %v1151 = vpop.permute.xlu0 %1150
  %v1153 = vadd.f32 %v80, %v1151
  %1154 = vmatprep.subr.bf16.mxu0 0
  %1155 = vmatpush1.bf16.msra.mxu0 %v243
  %1156 = vmatprep.subr.bf16.mxu0 0
  %1157 = vmatpush1.bf16.msra.mxu0 %v245
  %1158 = vmatprep.subr.bf16.mxu0 0
  %1159 = vmatpush1.bf16.msra.mxu0 0
  %1160 = vmatprep.subr.bf16.mxu0 0
  %1161 = vmatpush1.bf16.msra.mxu0 0
  %1162 = vmatprep.subr.bf16.mxu0 0
  %1163 = vmatpush1.bf16.msra.mxu0 0
  %1164 = vmatprep.subr.bf16.mxu0 0
  %1165 = vmatpush1.bf16.msra.mxu0 0
  %1166 = vmatprep.subr.bf16.mxu0 0
  %1167 = vmatpush1.bf16.msra.mxu0 0
  %1168 = vmatprep.subr.bf16.mxu0 0
  %1169 = vmatpush1.bf16.msra.mxu0 0
  %1170 = vmatprep.subr.bf16.mxu0 0
  %1171 = vmatpush1.bf16.msra.mxu0 0
  %1172 = vmatprep.subr.bf16.mxu0 0
  %1173 = vmatpush1.bf16.msra.mxu0 0
  %1174 = vmatprep.subr.bf16.mxu0 0
  %1175 = vmatpush1.bf16.msra.mxu0 0
  %1176 = vmatprep.subr.bf16.mxu0 0
  %1177 = vmatpush1.bf16.msra.mxu0 0
  %1178 = vmatprep.subr.bf16.mxu0 0
  %1179 = vmatpush1.bf16.msra.mxu0 0
  %1180 = vmatprep.subr.bf16.mxu0 0
  %1181 = vmatpush1.bf16.msra.mxu0 0
  %1182 = vmatprep.subr.bf16.mxu0 0
  %1183 = vmatpush1.bf16.msra.mxu0 0
  %1184 = vmatprep.subr.bf16.mxu0 0
  %1185 = vmatpush1.bf16.msra.mxu0 0
  %1186 = vmatprep.mubr.bf16.mxu0 0
  %1187 = vmatmul.mubr.bf16.gmra.mrb[0].mxu0 %v1021
  %v1188 = vpop.f32.mrb[0].mxu0
  %v1189 = vadd.f32 0.0, %v1188
  %v1190 = vpop.f32.mrb[0].mxu0
  %v1191 = vpop.f32.mrb[0].mxu0
  %v1192 = vpop.f32.mrb[0].mxu0
  %1193 = vdwg.mxu0
  %1195 = vrot.lane.b32.xlu0 %v1189, 96
  %v1196 = vpop.permute.xlu0 %1195
  %v1198 = vadd.f32 %v80, %v1196
  %v1199 = vxor.u32 %v1063, 2147483648
  %v1200 = vmul.f32 %v1199, 1.442695
  %v1201 = vpow.pop %v1200
  %v1202 = vadd.f32 %v1201, 1.0
  %v1203 = vrcp.pop %v1202
  %v1204 = vmul.f32 1.0, %v1203
  %v1205 = vxor.u32 %v1108, 2147483648
  %v1206 = vmul.f32 %v1205, 1.442695
  %v1207 = vpow.pop %v1206
  %v1208 = vadd.f32 %v1207, 1.0
  %v1209 = vrcp.pop %v1208
  %v1210 = vmul.f32 1.0, %v1209
  %v1211 = vxor.u32 %v1198, 2147483648
  %v1212 = vmul.f32 %v1211, 1.442695
  %v1213 = vpow.pop %v1212
  %v1214 = vadd.f32 %v1213, 1.0
  %v1215 = vrcp.pop %v1214
  %v1216 = vmul.f32 1.0, %v1215
  %v1217 = vtanh.pop %v1153
  %v1219 = vrot.slane %v1008, 6
  %v1221 = vmul.f32 %v1210, %v1219
  %1223 = vrot.lane.b32.xlu0 %v1217, 64
  %v1224 = vpop.permute.xlu0 %1223
  %v1226 = vmul.f32 %v1204, %v1224
  %1228 = vrot.lane.b32.xlu0 %v1226, 32
  %v1229 = vpop.permute.xlu0 %1228
  %v1231 = vadd.f32 %v1221, %v1229
  %v1232 = vtanh.pop %v1231
  %1234 = vrot.lane.b32.xlu0 %v1232, 64
  %v1235 = vpop.permute.xlu0 %1234
  %v1237 = vmul.f32 %v1216, %v1235
  %v1238 = vpack.c.bf16 %v1237, %v1237
  %1240 = vrot.lane.b32.xlu0 %v1238, 32
  %v1241 = vpop.permute.xlu0 %1240
  %v1243 = vsel %vm95, %v1241, 0
  %1245 = vmatprep.subr.bf16.mxu0 0
  %1246 = vmatpush1.bf16.msra.mxu0 %v91
  %1247 = vmatprep.subr.bf16.mxu0 0
  %1248 = vmatpush1.bf16.msra.mxu0 %v92
  %1249 = vmatprep.subr.bf16.mxu0 0
  %1250 = vmatpush1.bf16.msra.mxu0 0
  %1251 = vmatprep.subr.bf16.mxu0 0
  %1252 = vmatpush1.bf16.msra.mxu0 0
  %1253 = vmatprep.subr.bf16.mxu0 0
  %1254 = vmatpush1.bf16.msra.mxu0 0
  %1255 = vmatprep.subr.bf16.mxu0 0
  %1256 = vmatpush1.bf16.msra.mxu0 0
  %1257 = vmatprep.subr.bf16.mxu0 0
  %1258 = vmatpush1.bf16.msra.mxu0 0
  %1259 = vmatprep.subr.bf16.mxu0 0
  %1260 = vmatpush1.bf16.msra.mxu0 0
  %1261 = vmatprep.subr.bf16.mxu0 0
  %1262 = vmatpush1.bf16.msra.mxu0 0
  %1263 = vmatprep.subr.bf16.mxu0 0
  %1264 = vmatpush1.bf16.msra.mxu0 0
  %1265 = vmatprep.subr.bf16.mxu0 0
  %1266 = vmatpush1.bf16.msra.mxu0 0
  %1267 = vmatprep.subr.bf16.mxu0 0
  %1268 = vmatpush1.bf16.msra.mxu0 0
  %1269 = vmatprep.subr.bf16.mxu0 0
  %1270 = vmatpush1.bf16.msra.mxu0 0
  %1271 = vmatprep.subr.bf16.mxu0 0
  %1272 = vmatpush1.bf16.msra.mxu0 0
  %1273 = vmatprep.subr.bf16.mxu0 0
  %1274 = vmatpush1.bf16.msra.mxu0 0
  %1275 = vmatprep.subr.bf16.mxu0 0
  %1276 = vmatpush1.bf16.msra.mxu0 0
  %1277 = vmatprep.mubr.bf16.mxu0 0
  %1278 = vmatmul.mubr.bf16.gmra.mrb[0].mxu0 %v1243
  %v1279 = vpop.f32.mrb[0].mxu0
  %v1280 = vadd.f32 0.0, %v1279
  %v1281 = vpop.f32.mrb[0].mxu0
  %v1282 = vpop.f32.mrb[0].mxu0
  %v1283 = vpop.f32.mrb[0].mxu0
  %1284 = vdwg.mxu0
  %v1286 = vrot.slane %v1280, 6
  %v1288 = vadd.f32 %v80, %v1286
  %1289 = vmatprep.subr.bf16.mxu0 0
  %1290 = vmatpush1.bf16.msra.mxu0 %v141
  %1291 = vmatprep.subr.bf16.mxu0 0
  %1292 = vmatpush1.bf16.msra.mxu0 %v143
  %1293 = vmatprep.subr.bf16.mxu0 0
  %1294 = vmatpush1.bf16.msra.mxu0 0
  %1295 = vmatprep.subr.bf16.mxu0 0
  %1296 = vmatpush1.bf16.msra.mxu0 0
  %1297 = vmatprep.subr.bf16.mxu0 0
  %1298 = vmatpush1.bf16.msra.mxu0 0
  %1299 = vmatprep.subr.bf16.mxu0 0
  %1300 = vmatpush1.bf16.msra.mxu0 0
  %1301 = vmatprep.subr.bf16.mxu0 0
  %1302 = vmatpush1.bf16.msra.mxu0 0
  %1303 = vmatprep.subr.bf16.mxu0 0
  %1304 = vmatpush1.bf16.msra.mxu0 0
  %1305 = vmatprep.subr.bf16.mxu0 0
  %1306 = vmatpush1.bf16.msra.mxu0 0
  %1307 = vmatprep.subr.bf16.mxu0 0
  %1308 = vmatpush1.bf16.msra.mxu0 0
  %1309 = vmatprep.subr.bf16.mxu0 0
  %1310 = vmatpush1.bf16.msra.mxu0 0
  %1311 = vmatprep.subr.bf16.mxu0 0
  %1312 = vmatpush1.bf16.msra.mxu0 0
  %1313 = vmatprep.subr.bf16.mxu0 0
  %1314 = vmatpush1.bf16.msra.mxu0 0
  %1315 = vmatprep.subr.bf16.mxu0 0
  %1316 = vmatpush1.bf16.msra.mxu0 0
  %1317 = vmatprep.subr.bf16.mxu0 0
  %1318 = vmatpush1.bf16.msra.mxu0 0
  %1319 = vmatprep.subr.bf16.mxu0 0
  %1320 = vmatpush1.bf16.msra.mxu0 0
  %1321 = vmatprep.mubr.bf16.mxu0 0
  %1322 = vmatmul.mubr.bf16.gmra.mrb[0].mxu0 %v1243
  %v1323 = vpop.f32.mrb[0].mxu0
  %v1324 = vadd.f32 0.0, %v1323
  %v1325 = vpop.f32.mrb[0].mxu0
  %v1326 = vpop.f32.mrb[0].mxu0
  %v1327 = vpop.f32.mrb[0].mxu0
  %1328 = vdwg.mxu0
  %v1330 = vrot.slane %v1324, 6
  %1331 = vrot.lane.b32.xlu0 %v1330, 32
  %v1332 = vpop.permute.xlu0 %1331
  %v1334 = vadd.f32 %v80, %v1332
  %1335 = vmatprep.subr.bf16.mxu0 0
  %1336 = vmatpush1.bf16.msra.mxu0 %v192
  %1337 = vmatprep.subr.bf16.mxu0 0
  %1338 = vmatpush1.bf16.msra.mxu0 %v194
  %1339 = vmatprep.subr.bf16.mxu0 0
  %1340 = vmatpush1.bf16.msra.mxu0 0
  %1341 = vmatprep.subr.bf16.mxu0 0
  %1342 = vmatpush1.bf16.msra.mxu0 0
  %1343 = vmatprep.subr.bf16.mxu0 0
  %1344 = vmatpush1.bf16.msra.mxu0 0
  %1345 = vmatprep.subr.bf16.mxu0 0
  %1346 = vmatpush1.bf16.msra.mxu0 0
  %1347 = vmatprep.subr.bf16.mxu0 0
  %1348 = vmatpush1.bf16.msra.mxu0 0
  %1349 = vmatprep.subr.bf16.mxu0 0
  %1350 = vmatpush1.bf16.msra.mxu0 0
  %1351 = vmatprep.subr.bf16.mxu0 0
  %1352 = vmatpush1.bf16.msra.mxu0 0
  %1353 = vmatprep.subr.bf16.mxu0 0
  %1354 = vmatpush1.bf16.msra.mxu0 0
  %1355 = vmatprep.subr.bf16.mxu0 0
  %1356 = vmatpush1.bf16.msra.mxu0 0
  %1357 = vmatprep.subr.bf16.mxu0 0
  %1358 = vmatpush1.bf16.msra.mxu0 0
  %1359 = vmatprep.subr.bf16.mxu0 0
  %1360 = vmatpush1.bf16.msra.mxu0 0
  %1361 = vmatprep.subr.bf16.mxu0 0
  %1362 = vmatpush1.bf16.msra.mxu0 0
  %1363 = vmatprep.subr.bf16.mxu0 0
  %1364 = vmatpush1.bf16.msra.mxu0 0
  %1365 = vmatprep.subr.bf16.mxu0 0
  %1366 = vmatpush1.bf16.msra.mxu0 0
  %1367 = vmatprep.mubr.bf16.mxu0 0
  %1368 = vmatmul.mubr.bf16.gmra.mrb[0].mxu0 %v1243
  %v1369 = vpop.f32.mrb[0].mxu0
  %v1370 = vadd.f32 0.0, %v1369
  %v1371 = vpop.f32.mrb[0].mxu0
  %v1372 = vpop.f32.mrb[0].mxu0
  %v1373 = vpop.f32.mrb[0].mxu0
  %1374 = vdwg.mxu0
  %v1376 = vrot.slane %v1370, 6
  %1377 = vrot.lane.b32.xlu0 %v1376, 64
  %v1378 = vpop.permute.xlu0 %1377
  %v1380 = vadd.f32 %v80, %v1378
  %1381 = vmatprep.subr.bf16.mxu0 0
  %1382 = vmatpush1.bf16.msra.mxu0 %v243
  %1383 = vmatprep.subr.bf16.mxu0 0
  %1384 = vmatpush1.bf16.msra.mxu0 %v245
  %1385 = vmatprep.subr.bf16.mxu0 0
  %1386 = vmatpush1.bf16.msra.mxu0 0
  %1387 = vmatprep.subr.bf16.mxu0 0
  %1388 = vmatpush1.bf16.msra.mxu0 0
  %1389 = vmatprep.subr.bf16.mxu0 0
  %1390 = vmatpush1.bf16.msra.mxu0 0
  %1391 = vmatprep.subr.bf16.mxu0 0
  %1392 = vmatpush1.bf16.msra.mxu0 0
  %1393 = vmatprep.subr.bf16.mxu0 0
  %1394 = vmatpush1.bf16.msra.mxu0 0
  %1395 = vmatprep.subr.bf16.mxu0 0
  %1396 = vmatpush1.bf16.msra.mxu0 0
  %1397 = vmatprep.subr.bf16.mxu0 0
  %1398 = vmatpush1.bf16.msra.mxu0 0
  %1399 = vmatprep.subr.bf16.mxu0 0
  %1400 = vmatpush1.bf16.msra.mxu0 0
  %1401 = vmatprep.subr.bf16.mxu0 0
  %1402 = vmatpush1.bf16.msra.mxu0 0
  %1403 = vmatprep.subr.bf16.mxu0 0
  %1404 = vmatpush1.bf16.msra.mxu0 0
  %1405 = vmatprep.subr.bf16.mxu0 0
  %1406 = vmatpush1.bf16.msra.mxu0 0
  %1407 = vmatprep.subr.bf16.mxu0 0
  %1408 = vmatpush1.bf16.msra.mxu0 0
  %1409 = vmatprep.subr.bf16.mxu0 0
  %1410 = vmatpush1.bf16.msra.mxu0 0
  %1411 = vmatprep.subr.bf16.mxu0 0
  %1412 = vmatpush1.bf16.msra.mxu0 0
  %1413 = vmatprep.mubr.bf16.mxu0 0
  %1414 = vmatmul.mubr.bf16.gmra.mrb[0].mxu0 %v1243
  %v1415 = vpop.f32.mrb[0].mxu0
  %v1416 = vadd.f32 0.0, %v1415
  %v1417 = vpop.f32.mrb[0].mxu0
  %v1418 = vpop.f32.mrb[0].mxu0
  %v1419 = vpop.f32.mrb[0].mxu0
  %1420 = vdwg.mxu0
  %v1422 = vrot.slane %v1416, 6
  %1423 = vrot.lane.b32.xlu0 %v1422, 96
  %v1424 = vpop.permute.xlu0 %1423
  %v1426 = vadd.f32 %v80, %v1424
  %v1427 = vxor.u32 %v1288, 2147483648
  %v1428 = vmul.f32 %v1427, 1.442695
  %v1429 = vpow.pop %v1428
  %v1430 = vadd.f32 %v1429, 1.0
  %v1431 = vrcp.pop %v1430
  %v1432 = vmul.f32 1.0, %v1431
  %v1433 = vxor.u32 %v1334, 2147483648
  %v1434 = vmul.f32 %v1433, 1.442695
  %v1435 = vpow.pop %v1434
  %v1436 = vadd.f32 %v1435, 1.0
  %v1437 = vrcp.pop %v1436
  %v1438 = vmul.f32 1.0, %v1437
  %v1439 = vxor.u32 %v1426, 2147483648
  %v1440 = vmul.f32 %v1439, 1.442695
  %v1441 = vpow.pop %v1440
  %v1442 = vadd.f32 %v1441, 1.0
  %v1443 = vrcp.pop %v1442
  %v1444 = vmul.f32 1.0, %v1443
  %v1445 = vtanh.pop %v1380
  %v1447 = vrot.slane %v1231, 6
  %v1449 = vmul.f32 %v1438, %v1447
  %1451 = vrot.lane.b32.xlu0 %v1445, 64
  %v1452 = vpop.permute.xlu0 %1451
  %v1454 = vmul.f32 %v1432, %v1452
  %1456 = vrot.lane.b32.xlu0 %v1454, 32
  %v1457 = vpop.permute.xlu0 %1456
  %v1459 = vadd.f32 %v1449, %v1457
  %v1460 = vtanh.pop %v1459
  %1462 = vrot.lane.b32.xlu0 %v1460, 64
  %v1463 = vpop.permute.xlu0 %1462
  %v1465 = vmul.f32 %v1444, %v1463
  %v1466 = vpack.c.bf16 %v1465, %v1465
  %v1468 = vrot.slane %v1466, 1
  %1469 = vrot.lane.b32.xlu0 %v1468, 32
  %v1470 = vpop.permute.xlu0 %1469
  %v1472 = vsel %vm95, %v1470, 0
  %1474 = vmatprep.subr.bf16.mxu0 0
  %1475 = vmatpush1.bf16.msra.mxu0 %v91
  %1476 = vmatprep.subr.bf16.mxu0 0
  %1477 = vmatpush1.bf16.msra.mxu0 %v92
  %1478 = vmatprep.subr.bf16.mxu0 0
  %1479 = vmatpush1.bf16.msra.mxu0 0
  %1480 = vmatprep.subr.bf16.mxu0 0
  %1481 = vmatpush1.bf16.msra.mxu0 0
  %1482 = vmatprep.subr.bf16.mxu0 0
  %1483 = vmatpush1.bf16.msra.mxu0 0
  %1484 = vmatprep.subr.bf16.mxu0 0
  %1485 = vmatpush1.bf16.msra.mxu0 0
  %1486 = vmatprep.subr.bf16.mxu0 0
  %1487 = vmatpush1.bf16.msra.mxu0 0
  %1488 = vmatprep.subr.bf16.mxu0 0
  %1489 = vmatpush1.bf16.msra.mxu0 0
  %1490 = vmatprep.subr.bf16.mxu0 0
  %1491 = vmatpush1.bf16.msra.mxu0 0
  %1492 = vmatprep.subr.bf16.mxu0 0
  %1493 = vmatpush1.bf16.msra.mxu0 0
  %1494 = vmatprep.subr.bf16.mxu0 0
  %1495 = vmatpush1.bf16.msra.mxu0 0
  %1496 = vmatprep.subr.bf16.mxu0 0
  %1497 = vmatpush1.bf16.msra.mxu0 0
  %1498 = vmatprep.subr.bf16.mxu0 0
  %1499 = vmatpush1.bf16.msra.mxu0 0
  %1500 = vmatprep.subr.bf16.mxu0 0
  %1501 = vmatpush1.bf16.msra.mxu0 0
  %1502 = vmatprep.subr.bf16.mxu0 0
  %1503 = vmatpush1.bf16.msra.mxu0 0
  %1504 = vmatprep.subr.bf16.mxu0 0
  %1505 = vmatpush1.bf16.msra.mxu0 0
  %1506 = vmatprep.mubr.bf16.mxu0 0
  %1507 = vmatmul.mubr.bf16.gmra.mrb[0].mxu0 %v1472
  %v1508 = vpop.f32.mrb[0].mxu0
  %v1509 = vadd.f32 0.0, %v1508
  %v1510 = vpop.f32.mrb[0].mxu0
  %v1511 = vpop.f32.mrb[0].mxu0
  %v1512 = vpop.f32.mrb[0].mxu0
  %1513 = vdwg.mxu0
  %v1515 = vrot.slane %v1509, 4
  %v1517 = vadd.f32 %v80, %v1515
  %1518 = vmatprep.subr.bf16.mxu0 0
  %1519 = vmatpush1.bf16.msra.mxu0 %v141
  %1520 = vmatprep.subr.bf16.mxu0 0
  %1521 = vmatpush1.bf16.msra.mxu0 %v143
  %1522 = vmatprep.subr.bf16.mxu0 0
  %1523 = vmatpush1.bf16.msra.mxu0 0
  %1524 = vmatprep.subr.bf16.mxu0 0
  %1525 = vmatpush1.bf16.msra.mxu0 0
  %1526 = vmatprep.subr.bf16.mxu0 0
  %1527 = vmatpush1.bf16.msra.mxu0 0
  %1528 = vmatprep.subr.bf16.mxu0 0
  %1529 = vmatpush1.bf16.msra.mxu0 0
  %1530 = vmatprep.subr.bf16.mxu0 0
  %1531 = vmatpush1.bf16.msra.mxu0 0
  %1532 = vmatprep.subr.bf16.mxu0 0
  %1533 = vmatpush1.bf16.msra.mxu0 0
  %1534 = vmatprep.subr.bf16.mxu0 0
  %1535 = vmatpush1.bf16.msra.mxu0 0
  %1536 = vmatprep.subr.bf16.mxu0 0
  %1537 = vmatpush1.bf16.msra.mxu0 0
  %1538 = vmatprep.subr.bf16.mxu0 0
  %1539 = vmatpush1.bf16.msra.mxu0 0
  %1540 = vmatprep.subr.bf16.mxu0 0
  %1541 = vmatpush1.bf16.msra.mxu0 0
  %1542 = vmatprep.subr.bf16.mxu0 0
  %1543 = vmatpush1.bf16.msra.mxu0 0
  %1544 = vmatprep.subr.bf16.mxu0 0
  %1545 = vmatpush1.bf16.msra.mxu0 0
  %1546 = vmatprep.subr.bf16.mxu0 0
  %1547 = vmatpush1.bf16.msra.mxu0 0
  %1548 = vmatprep.subr.bf16.mxu0 0
  %1549 = vmatpush1.bf16.msra.mxu0 0
  %1550 = vmatprep.mubr.bf16.mxu0 0
  %1551 = vmatmul.mubr.bf16.gmra.mrb[0].mxu0 %v1472
  %v1552 = vpop.f32.mrb[0].mxu0
  %v1553 = vadd.f32 0.0, %v1552
  %v1554 = vpop.f32.mrb[0].mxu0
  %v1555 = vpop.f32.mrb[0].mxu0
  %v1556 = vpop.f32.mrb[0].mxu0
  %1557 = vdwg.mxu0
  %v1559 = vrot.slane %v1553, 4
  %1560 = vrot.lane.b32.xlu0 %v1559, 32
  %v1561 = vpop.permute.xlu0 %1560
  %v1563 = vadd.f32 %v80, %v1561
  %1564 = vmatprep.subr.bf16.mxu0 0
  %1565 = vmatpush1.bf16.msra.mxu0 %v192
  %1566 = vmatprep.subr.bf16.mxu0 0
  %1567 = vmatpush1.bf16.msra.mxu0 %v194
  %1568 = vmatprep.subr.bf16.mxu0 0
  %1569 = vmatpush1.bf16.msra.mxu0 0
  %1570 = vmatprep.subr.bf16.mxu0 0
  %1571 = vmatpush1.bf16.msra.mxu0 0
  %1572 = vmatprep.subr.bf16.mxu0 0
  %1573 = vmatpush1.bf16.msra.mxu0 0
  %1574 = vmatprep.subr.bf16.mxu0 0
  %1575 = vmatpush1.bf16.msra.mxu0 0
  %1576 = vmatprep.subr.bf16.mxu0 0
  %1577 = vmatpush1.bf16.msra.mxu0 0
  %1578 = vmatprep.subr.bf16.mxu0 0
  %1579 = vmatpush1.bf16.msra.mxu0 0
  %1580 = vmatprep.subr.bf16.mxu0 0
  %1581 = vmatpush1.bf16.msra.mxu0 0
  %1582 = vmatprep.subr.bf16.mxu0 0
  %1583 = vmatpush1.bf16.msra.mxu0 0
  %1584 = vmatprep.subr.bf16.mxu0 0
  %1585 = vmatpush1.bf16.msra.mxu0 0
  %1586 = vmatprep.subr.bf16.mxu0 0
  %1587 = vmatpush1.bf16.msra.mxu0 0
  %1588 = vmatprep.subr.bf16.mxu0 0
  %1589 = vmatpush1.bf16.msra.mxu0 0
  %1590 = vmatprep.subr.bf16.mxu0 0
  %1591 = vmatpush1.bf16.msra.mxu0 0
  %1592 = vmatprep.subr.bf16.mxu0 0
  %1593 = vmatpush1.bf16.msra.mxu0 0
  %1594 = vmatprep.subr.bf16.mxu0 0
  %1595 = vmatpush1.bf16.msra.mxu0 0
  %1596 = vmatprep.mubr.bf16.mxu0 0
  %1597 = vmatmul.mubr.bf16.gmra.mrb[0].mxu0 %v1472
  %v1598 = vpop.f32.mrb[0].mxu0
  %v1599 = vadd.f32 0.0, %v1598
  %v1600 = vpop.f32.mrb[0].mxu0
  %v1601 = vpop.f32.mrb[0].mxu0
  %v1602 = vpop.f32.mrb[0].mxu0
  %1603 = vdwg.mxu0
  %v1605 = vrot.slane %v1599, 4
  %1606 = vrot.lane.b32.xlu0 %v1605, 64
  %v1607 = vpop.permute.xlu0 %1606
  %v1609 = vadd.f32 %v80, %v1607
  %1610 = vmatprep.subr.bf16.mxu0 0
  %1611 = vmatpush1.bf16.msra.mxu0 %v243
  %1612 = vmatprep.subr.bf16.mxu0 0
  %1613 = vmatpush1.bf16.msra.mxu0 %v245
  %1614 = vmatprep.subr.bf16.mxu0 0
  %1615 = vmatpush1.bf16.msra.mxu0 0
  %1616 = vmatprep.subr.bf16.mxu0 0
  %1617 = vmatpush1.bf16.msra.mxu0 0
  %1618 = vmatprep.subr.bf16.mxu0 0
  %1619 = vmatpush1.bf16.msra.mxu0 0
  %1620 = vmatprep.subr.bf16.mxu0 0
  %1621 = vmatpush1.bf16.msra.mxu0 0
  %1622 = vmatprep.subr.bf16.mxu0 0
  %1623 = vmatpush1.bf16.msra.mxu0 0
  %1624 = vmatprep.subr.bf16.mxu0 0
  %1625 = vmatpush1.bf16.msra.mxu0 0
  %1626 = vmatprep.subr.bf16.mxu0 0
  %1627 = vmatpush1.bf16.msra.mxu0 0
  %1628 = vmatprep.subr.bf16.mxu0 0
  %1629 = vmatpush1.bf16.msra.mxu0 0
  %1630 = vmatprep.subr.bf16.mxu0 0
  %1631 = vmatpush1.bf16.msra.mxu0 0
  %1632 = vmatprep.subr.bf16.mxu0 0
  %1633 = vmatpush1.bf16.msra.mxu0 0
  %1634 = vmatprep.subr.bf16.mxu0 0
  %1635 = vmatpush1.bf16.msra.mxu0 0
  %1636 = vmatprep.subr.bf16.mxu0 0
  %1637 = vmatpush1.bf16.msra.mxu0 0
  %1638 = vmatprep.subr.bf16.mxu0 0
  %1639 = vmatpush1.bf16.msra.mxu0 0
  %1640 = vmatprep.subr.bf16.mxu0 0
  %1641 = vmatpush1.bf16.msra.mxu0 0
  %1642 = vmatprep.mubr.bf16.mxu0 0
  %1643 = vmatmul.mubr.bf16.gmra.mrb[0].mxu0 %v1472
  %v1644 = vpop.f32.mrb[0].mxu0
  %v1645 = vadd.f32 0.0, %v1644
  %v1646 = vpop.f32.mrb[0].mxu0
  %v1647 = vpop.f32.mrb[0].mxu0
  %v1648 = vpop.f32.mrb[0].mxu0
  %1649 = vdwg.mxu0
  %v1651 = vrot.slane %v1645, 4
  %1652 = vrot.lane.b32.xlu0 %v1651, 96
  %v1653 = vpop.permute.xlu0 %1652
  %v1655 = vadd.f32 %v80, %v1653
  %v1656 = vxor.u32 %v1517, 2147483648
  %v1657 = vmul.f32 %v1656, 1.442695
  %v1658 = vpow.pop %v1657
  %v1659 = vadd.f32 %v1658, 1.0
  %v1660 = vrcp.pop %v1659
  %v1661 = vmul.f32 1.0, %v1660
  %v1662 = vxor.u32 %v1563, 2147483648
  %v1663 = vmul.f32 %v1662, 1.442695
  %v1664 = vpow.pop %v1663
  %v1665 = vadd.f32 %v1664, 1.0
  %v1666 = vrcp.pop %v1665
  %v1667 = vmul.f32 1.0, %v1666
  %v1668 = vxor.u32 %v1655, 2147483648
  %v1669 = vmul.f32 %v1668, 1.442695
  %v1670 = vpow.pop %v1669
  %v1671 = vadd.f32 %v1670, 1.0
  %v1672 = vrcp.pop %v1671
  %v1673 = vmul.f32 1.0, %v1672
  %v1674 = vtanh.pop %v1609
  %v1676 = vrot.slane %v1459, 6
  %v1678 = vmul.f32 %v1667, %v1676
  %1680 = vrot.lane.b32.xlu0 %v1674, 64
  %v1681 = vpop.permute.xlu0 %1680
  %v1683 = vmul.f32 %v1661, %v1681
  %1685 = vrot.lane.b32.xlu0 %v1683, 32
  %v1686 = vpop.permute.xlu0 %1685
  %v1688 = vadd.f32 %v1678, %v1686
  %v1689 = vtanh.pop %v1688
  %1691 = vrot.lane.b32.xlu0 %v1689, 64
  %v1692 = vpop.permute.xlu0 %1691
  %v1694 = vmul.f32 %v1673, %v1692
  %v1695 = vpack.c.bf16 %v1694, %v1694
  %v1697 = vrot.slane %v1695, 2
  %1698 = vrot.lane.b32.xlu0 %v1697, 32
  %v1699 = vpop.permute.xlu0 %1698
  %v1701 = vsel %vm95, %v1699, 0
  %1703 = vmatprep.subr.bf16.mxu0 0
  %1704 = vmatpush1.bf16.msra.mxu0 %v91
  %1705 = vmatprep.subr.bf16.mxu0 0
  %1706 = vmatpush1.bf16.msra.mxu0 %v92
  %1707 = vmatprep.subr.bf16.mxu0 0
  %1708 = vmatpush1.bf16.msra.mxu0 0
  %1709 = vmatprep.subr.bf16.mxu0 0
  %1710 = vmatpush1.bf16.msra.mxu0 0
  %1711 = vmatprep.subr.bf16.mxu0 0
  %1712 = vmatpush1.bf16.msra.mxu0 0
  %1713 = vmatprep.subr.bf16.mxu0 0
  %1714 = vmatpush1.bf16.msra.mxu0 0
  %1715 = vmatprep.subr.bf16.mxu0 0
  %1716 = vmatpush1.bf16.msra.mxu0 0
  %1717 = vmatprep.subr.bf16.mxu0 0
  %1718 = vmatpush1.bf16.msra.mxu0 0
  %1719 = vmatprep.subr.bf16.mxu0 0
  %1720 = vmatpush1.bf16.msra.mxu0 0
  %1721 = vmatprep.subr.bf16.mxu0 0
  %1722 = vmatpush1.bf16.msra.mxu0 0
  %1723 = vmatprep.subr.bf16.mxu0 0
  %1724 = vmatpush1.bf16.msra.mxu0 0
  %1725 = vmatprep.subr.bf16.mxu0 0
  %1726 = vmatpush1.bf16.msra.mxu0 0
  %1727 = vmatprep.subr.bf16.mxu0 0
  %1728 = vmatpush1.bf16.msra.mxu0 0
  %1729 = vmatprep.subr.bf16.mxu0 0
  %1730 = vmatpush1.bf16.msra.mxu0 0
  %1731 = vmatprep.subr.bf16.mxu0 0
  %1732 = vmatpush1.bf16.msra.mxu0 0
  %1733 = vmatprep.subr.bf16.mxu0 0
  %1734 = vmatpush1.bf16.msra.mxu0 0
  %1735 = vmatprep.mubr.bf16.mxu0 0
  %1736 = vmatmul.mubr.bf16.gmra.mrb[0].mxu0 %v1701
  %v1737 = vpop.f32.mrb[0].mxu0
  %v1738 = vadd.f32 0.0, %v1737
  %v1739 = vpop.f32.mrb[0].mxu0
  %v1740 = vpop.f32.mrb[0].mxu0
  %v1741 = vpop.f32.mrb[0].mxu0
  %1742 = vdwg.mxu0
  %v1744 = vrot.slane %v1738, 2
  %v1746 = vadd.f32 %v80, %v1744
  %1747 = vmatprep.subr.bf16.mxu0 0
  %1748 = vmatpush1.bf16.msra.mxu0 %v141
  %1749 = vmatprep.subr.bf16.mxu0 0
  %1750 = vmatpush1.bf16.msra.mxu0 %v143
  %1751 = vmatprep.subr.bf16.mxu0 0
  %1752 = vmatpush1.bf16.msra.mxu0 0
  %1753 = vmatprep.subr.bf16.mxu0 0
  %1754 = vmatpush1.bf16.msra.mxu0 0
  %1755 = vmatprep.subr.bf16.mxu0 0
  %1756 = vmatpush1.bf16.msra.mxu0 0
  %1757 = vmatprep.subr.bf16.mxu0 0
  %1758 = vmatpush1.bf16.msra.mxu0 0
  %1759 = vmatprep.subr.bf16.mxu0 0
  %1760 = vmatpush1.bf16.msra.mxu0 0
  %1761 = vmatprep.subr.bf16.mxu0 0
  %1762 = vmatpush1.bf16.msra.mxu0 0
  %1763 = vmatprep.subr.bf16.mxu0 0
  %1764 = vmatpush1.bf16.msra.mxu0 0
  %1765 = vmatprep.subr.bf16.mxu0 0
  %1766 = vmatpush1.bf16.msra.mxu0 0
  %1767 = vmatprep.subr.bf16.mxu0 0
  %1768 = vmatpush1.bf16.msra.mxu0 0
  %1769 = vmatprep.subr.bf16.mxu0 0
  %1770 = vmatpush1.bf16.msra.mxu0 0
  %1771 = vmatprep.subr.bf16.mxu0 0
  %1772 = vmatpush1.bf16.msra.mxu0 0
  %1773 = vmatprep.subr.bf16.mxu0 0
  %1774 = vmatpush1.bf16.msra.mxu0 0
  %1775 = vmatprep.subr.bf16.mxu0 0
  %1776 = vmatpush1.bf16.msra.mxu0 0
  %1777 = vmatprep.subr.bf16.mxu0 0
  %1778 = vmatpush1.bf16.msra.mxu0 0
  %1779 = vmatprep.mubr.bf16.mxu0 0
  %1780 = vmatmul.mubr.bf16.gmra.mrb[0].mxu0 %v1701
  %v1781 = vpop.f32.mrb[0].mxu0
  %v1782 = vadd.f32 0.0, %v1781
  %v1783 = vpop.f32.mrb[0].mxu0
  %v1784 = vpop.f32.mrb[0].mxu0
  %v1785 = vpop.f32.mrb[0].mxu0
  %1786 = vdwg.mxu0
  %v1788 = vrot.slane %v1782, 2
  %1789 = vrot.lane.b32.xlu0 %v1788, 32
  %v1790 = vpop.permute.xlu0 %1789
  %v1792 = vadd.f32 %v80, %v1790
  %1793 = vmatprep.subr.bf16.mxu0 0
  %1794 = vmatpush1.bf16.msra.mxu0 %v192
  %1795 = vmatprep.subr.bf16.mxu0 0
  %1796 = vmatpush1.bf16.msra.mxu0 %v194
  %1797 = vmatprep.subr.bf16.mxu0 0
  %1798 = vmatpush1.bf16.msra.mxu0 0
  %1799 = vmatprep.subr.bf16.mxu0 0
  %1800 = vmatpush1.bf16.msra.mxu0 0
  %1801 = vmatprep.subr.bf16.mxu0 0
  %1802 = vmatpush1.bf16.msra.mxu0 0
  %1803 = vmatprep.subr.bf16.mxu0 0
  %1804 = vmatpush1.bf16.msra.mxu0 0
  %1805 = vmatprep.subr.bf16.mxu0 0
  %1806 = vmatpush1.bf16.msra.mxu0 0
  %1807 = vmatprep.subr.bf16.mxu0 0
  %1808 = vmatpush1.bf16.msra.mxu0 0
  %1809 = vmatprep.subr.bf16.mxu0 0
  %1810 = vmatpush1.bf16.msra.mxu0 0
  %1811 = vmatprep.subr.bf16.mxu0 0
  %1812 = vmatpush1.bf16.msra.mxu0 0
  %1813 = vmatprep.subr.bf16.mxu0 0
  %1814 = vmatpush1.bf16.msra.mxu0 0
  %1815 = vmatprep.subr.bf16.mxu0 0
  %1816 = vmatpush1.bf16.msra.mxu0 0
  %1817 = vmatprep.subr.bf16.mxu0 0
  %1818 = vmatpush1.bf16.msra.mxu0 0
  %1819 = vmatprep.subr.bf16.mxu0 0
  %1820 = vmatpush1.bf16.msra.mxu0 0
  %1821 = vmatprep.subr.bf16.mxu0 0
  %1822 = vmatpush1.bf16.msra.mxu0 0
  %1823 = vmatprep.subr.bf16.mxu0 0
  %1824 = vmatpush1.bf16.msra.mxu0 0
  %1825 = vmatprep.mubr.bf16.mxu0 0
  %1826 = vmatmul.mubr.bf16.gmra.mrb[0].mxu0 %v1701
  %v1827 = vpop.f32.mrb[0].mxu0
  %v1828 = vadd.f32 0.0, %v1827
  %v1829 = vpop.f32.mrb[0].mxu0
  %v1830 = vpop.f32.mrb[0].mxu0
  %v1831 = vpop.f32.mrb[0].mxu0
  %1832 = vdwg.mxu0
  %v1834 = vrot.slane %v1828, 2
  %1835 = vrot.lane.b32.xlu0 %v1834, 64
  %v1836 = vpop.permute.xlu0 %1835
  %v1838 = vadd.f32 %v80, %v1836
  %1839 = vmatprep.subr.bf16.mxu0 0
  %1840 = vmatpush1.bf16.msra.mxu0 %v243
  %1841 = vmatprep.subr.bf16.mxu0 0
  %1842 = vmatpush1.bf16.msra.mxu0 %v245
  %1843 = vmatprep.subr.bf16.mxu0 0
  %1844 = vmatpush1.bf16.msra.mxu0 0
  %1845 = vmatprep.subr.bf16.mxu0 0
  %1846 = vmatpush1.bf16.msra.mxu0 0
  %1847 = vmatprep.subr.bf16.mxu0 0
  %1848 = vmatpush1.bf16.msra.mxu0 0
  %1849 = vmatprep.subr.bf16.mxu0 0
  %1850 = vmatpush1.bf16.msra.mxu0 0
  %1851 = vmatprep.subr.bf16.mxu0 0
  %1852 = vmatpush1.bf16.msra.mxu0 0
  %1853 = vmatprep.subr.bf16.mxu0 0
  %1854 = vmatpush1.bf16.msra.mxu0 0
  %1855 = vmatprep.subr.bf16.mxu0 0
  %1856 = vmatpush1.bf16.msra.mxu0 0
  %1857 = vmatprep.subr.bf16.mxu0 0
  %1858 = vmatpush1.bf16.msra.mxu0 0
  %1859 = vmatprep.subr.bf16.mxu0 0
  %1860 = vmatpush1.bf16.msra.mxu0 0
  %1861 = vmatprep.subr.bf16.mxu0 0
  %1862 = vmatpush1.bf16.msra.mxu0 0
  %1863 = vmatprep.subr.bf16.mxu0 0
  %1864 = vmatpush1.bf16.msra.mxu0 0
  %1865 = vmatprep.subr.bf16.mxu0 0
  %1866 = vmatpush1.bf16.msra.mxu0 0
  %1867 = vmatprep.subr.bf16.mxu0 0
  %1868 = vmatpush1.bf16.msra.mxu0 0
  %1869 = vmatprep.subr.bf16.mxu0 0
  %1870 = vmatpush1.bf16.msra.mxu0 0
  %1871 = vmatprep.mubr.bf16.mxu0 0
  %1872 = vmatmul.mubr.bf16.gmra.mrb[0].mxu0 %v1701
  %v1873 = vpop.f32.mrb[0].mxu0
  %v1874 = vadd.f32 0.0, %v1873
  %v1875 = vpop.f32.mrb[0].mxu0
  %v1876 = vpop.f32.mrb[0].mxu0
  %v1877 = vpop.f32.mrb[0].mxu0
  %1878 = vdwg.mxu0
  %v1880 = vrot.slane %v1874, 2
  %1881 = vrot.lane.b32.xlu0 %v1880, 96
  %v1882 = vpop.permute.xlu0 %1881
  %v1884 = vadd.f32 %v80, %v1882
  %v1885 = vxor.u32 %v1746, 2147483648
  %v1886 = vmul.f32 %v1885, 1.442695
  %v1887 = vpow.pop %v1886
  %v1888 = vadd.f32 %v1887, 1.0
  %v1889 = vrcp.pop %v1888
  %v1890 = vmul.f32 1.0, %v1889
  %v1891 = vxor.u32 %v1792, 2147483648
  %v1892 = vmul.f32 %v1891, 1.442695
  %v1893 = vpow.pop %v1892
  %v1894 = vadd.f32 %v1893, 1.0
  %v1895 = vrcp.pop %v1894
  %v1896 = vmul.f32 1.0, %v1895
  %v1897 = vxor.u32 %v1884, 2147483648
  %v1898 = vmul.f32 %v1897, 1.442695
  %v1899 = vpow.pop %v1898
  %v1900 = vadd.f32 %v1899, 1.0
  %v1901 = vrcp.pop %v1900
  %v1902 = vmul.f32 1.0, %v1901
  %v1903 = vtanh.pop %v1838
  %v1905 = vrot.slane %v1688, 6
  %v1907 = vmul.f32 %v1896, %v1905
  %1909 = vrot.lane.b32.xlu0 %v1903, 64
  %v1910 = vpop.permute.xlu0 %1909
  %v1912 = vmul.f32 %v1890, %v1910
  %1914 = vrot.lane.b32.xlu0 %v1912, 32
  %v1915 = vpop.permute.xlu0 %1914
  %v1917 = vadd.f32 %v1907, %v1915
  %v1918 = vtanh.pop %v1917
  %1920 = vrot.lane.b32.xlu0 %v1918, 64
  %v1921 = vpop.permute.xlu0 %1920
  %v1923 = vmul.f32 %v1902, %v1921
  %v1924 = vpack.c.bf16 %v1923, %v1923
  %v1925 = vlaneseq
  %v1926 = vshrl.u32 %v1925, 7
  %v1927 = vsub.s32 1, %v1926
  %v1928 = vrot.slane %v25, %v1927
  %v1930 = vrot.slane %v1924, 3
  %1931 = vrot.lane.b32.xlu0 %v1930, 32
  %v1932 = vpop.permute.xlu0 %1931
  %v1937 = vunpack.c.l.b16 %v17
  %v1938 = vunpack.c.l.b16 %v18
  %v1939 = vunpack.c.l.b16 %v19
  %v1940 = vunpack.c.l.b16 %v20
  %v1941 = vpack.c.b16 %v1938, %v1937
  %v1942 = vpack.c.b16 %v1940, %v1939
  %v1946 = vsel %vm95, %v1932, 0
  %1948 = vmatprep.subr.bf16.mxu0 0
  %1949 = vmatpush1.bf16.msra.mxu0 %v1941
  %1950 = vmatprep.subr.bf16.mxu0 0
  %1951 = vmatpush1.bf16.msra.mxu0 %v1942
  %1952 = vmatprep.subr.bf16.mxu0 0
  %1953 = vmatpush1.bf16.msra.mxu0 0
  %1954 = vmatprep.subr.bf16.mxu0 0
  %1955 = vmatpush1.bf16.msra.mxu0 0
  %1956 = vmatprep.subr.bf16.mxu0 0
  %1957 = vmatpush1.bf16.msra.mxu0 0
  %1958 = vmatprep.subr.bf16.mxu0 0
  %1959 = vmatpush1.bf16.msra.mxu0 0
  %1960 = vmatprep.subr.bf16.mxu0 0
  %1961 = vmatpush1.bf16.msra.mxu0 0
  %1962 = vmatprep.subr.bf16.mxu0 0
  %1963 = vmatpush1.bf16.msra.mxu0 0
  %1964 = vmatprep.subr.bf16.mxu0 0
  %1965 = vmatpush1.bf16.msra.mxu0 0
  %1966 = vmatprep.subr.bf16.mxu0 0
  %1967 = vmatpush1.bf16.msra.mxu0 0
  %1968 = vmatprep.subr.bf16.mxu0 0
  %1969 = vmatpush1.bf16.msra.mxu0 0
  %1970 = vmatprep.subr.bf16.mxu0 0
  %1971 = vmatpush1.bf16.msra.mxu0 0
  %1972 = vmatprep.subr.bf16.mxu0 0
  %1973 = vmatpush1.bf16.msra.mxu0 0
  %1974 = vmatprep.subr.bf16.mxu0 0
  %1975 = vmatpush1.bf16.msra.mxu0 0
  %1976 = vmatprep.subr.bf16.mxu0 0
  %1977 = vmatpush1.bf16.msra.mxu0 0
  %1978 = vmatprep.subr.bf16.mxu0 0
  %1979 = vmatpush1.bf16.msra.mxu0 0
  %1980 = vmatprep.mubr.bf16.mxu0 0
  %1981 = vmatmul.mubr.bf16.gmra.mrb[0].mxu0 %v1946
  %v1982 = vpop.f32.mrb[0].mxu0
  %v1983 = vadd.f32 %v1928, %v1982
  %v1984 = vpop.f32.mrb[0].mxu0
  %v1985 = vpop.f32.mrb[0].mxu0
  %v1986 = vpop.f32.mrb[0].mxu0
  %1987 = vdwg.mxu0
  %v1988 = vmax.f32 %v1983, -20.0
  %v1989 = vmin.f32 %v1988, 2.0
  %v1990 = vmul.f32 %v1989, 1.442695
  %v1991 = vpow.pop %v1990
  %1993 = vrot.lane.b32.xlu0 %v26, 34
  %v1994 = vpop.permute.xlu0 %1993
  %v1996 = vmul.f32 %v1991, %v1994
  %1998 = vrot.lane.b32.xlu0 %v1996, 126
  %v1999 = vpop.permute.xlu0 %1998
  %v2001 = vadd.f32 %v1983, %v1999
  %v2002 = vtanh.pop %v2001
  %vm2003 = vcmp.gt.f32.partialorder %v1983, 0.0
  %v2004 = vsel %vm2003, 1, 0
  %v2005 = vcvt.s32.f32 %v2004
  %v2006 = vmax.f32 %v1983, 0.0
  %v2008 = vrot.slane %v2006, 2
  %2009 = vrot.lane.b32.xlu0 %v2008, 96
  %v2010 = vpop.permute.xlu0 %2009
  %v2012 = vadd.f32 %v1923, %v2010
  %v2013 = vpack.c.bf16 %v2012, %v2012
  %v2014 = vlaneseq
  %v2015 = vshrl.u32 %v2014, 7
  %v2016 = vsub.s32 2, %v2015
  %v2017 = vrot.slane %v25, %v2016
  %v2019 = vrot.slane %v2013, 3
  %2020 = vrot.lane.b32.xlu0 %v2019, 32
  %v2021 = vpop.permute.xlu0 %2020
  %v2026 = vunpack.c.l.b16 %v21
  %v2027 = vunpack.c.l.b16 %v22
  %v2028 = vunpack.c.l.b16 %v23
  %v2029 = vunpack.c.l.b16 %v24
  %v2030 = vpack.c.b16 %v2027, %v2026
  %v2031 = vpack.c.b16 %v2029, %v2028
  %v2035 = vsel %vm95, %v2021, 0
  %2037 = vmatprep.subr.bf16.mxu0 0
  %2038 = vmatpush1.bf16.msra.mxu0 %v2030
  %2039 = vmatprep.subr.bf16.mxu0 0
  %2040 = vmatpush1.bf16.msra.mxu0 %v2031
  %2041 = vmatprep.subr.bf16.mxu0 0
  %2042 = vmatpush1.bf16.msra.mxu0 0
  %2043 = vmatprep.subr.bf16.mxu0 0
  %2044 = vmatpush1.bf16.msra.mxu0 0
  %2045 = vmatprep.subr.bf16.mxu0 0
  %2046 = vmatpush1.bf16.msra.mxu0 0
  %2047 = vmatprep.subr.bf16.mxu0 0
  %2048 = vmatpush1.bf16.msra.mxu0 0
  %2049 = vmatprep.subr.bf16.mxu0 0
  %2050 = vmatpush1.bf16.msra.mxu0 0
  %2051 = vmatprep.subr.bf16.mxu0 0
  %2052 = vmatpush1.bf16.msra.mxu0 0
  %2053 = vmatprep.subr.bf16.mxu0 0
  %2054 = vmatpush1.bf16.msra.mxu0 0
  %2055 = vmatprep.subr.bf16.mxu0 0
  %2056 = vmatpush1.bf16.msra.mxu0 0
  %2057 = vmatprep.subr.bf16.mxu0 0
  %2058 = vmatpush1.bf16.msra.mxu0 0
  %2059 = vmatprep.subr.bf16.mxu0 0
  %2060 = vmatpush1.bf16.msra.mxu0 0
  %2061 = vmatprep.subr.bf16.mxu0 0
  %2062 = vmatpush1.bf16.msra.mxu0 0
  %2063 = vmatprep.subr.bf16.mxu0 0
  %2064 = vmatpush1.bf16.msra.mxu0 0
  %2065 = vmatprep.subr.bf16.mxu0 0
  %2066 = vmatpush1.bf16.msra.mxu0 0
  %2067 = vmatprep.subr.bf16.mxu0 0
  %2068 = vmatpush1.bf16.msra.mxu0 0
  %2069 = vmatprep.mubr.bf16.mxu0 0
  %2070 = vmatmul.mubr.bf16.gmra.mrb[0].mxu0 %v2035
  %v2071 = vpop.f32.mrb[0].mxu0
  %v2072 = vadd.f32 %v2017, %v2071
  %v2073 = vpop.f32.mrb[0].mxu0
  %v2074 = vpop.f32.mrb[0].mxu0
  %v2075 = vpop.f32.mrb[0].mxu0
  %2076 = vdwg.mxu0
  %v2077 = vmul.f32 %v2002, 0.1
  %2079 = vrot.lane.b32.xlu0 %v2077, 100
  %v2080 = vpop.permute.xlu0 %2079
  %v2082 = vadd.f32 %v26, %v2080
  %v2083 = vand.u32 2147483647, %v2082
  %vm2084 = vcmp.le.f32.partialorder %v2083, 0.7853982
  %vm2085 = vcmp.lt.s32.totalorder %v2082, 0
  %v2086 = vand.u32 %v2082, 2139095040
  %v2087 = vshrl.u32 %v2086, 23
  %v2088 = vsub.s32 %v2087, 127
  %v2089 = vand.u32 2147483647, %v2082
  %v2090 = vand.u32 %v2089, 8388607
  %v2091 = vor.u32 %v2090, 8388608
  %v2092 = vsub.s32 0, %v2091
  %v2093 = vadd.s32 %v2088, 1
  %vm2094 = vcmp.gt.s32.totalorder %v2093, 0
  %v2095 = vsel %vm2094, %v2093, 0
  %v2096 = vshrl.u32 %v2095, 5
  %v2097 = vand.u32 %v2095, 31
  %v2098 = vsub.s32 32, %v2097
  %v2099 = vshrl.u32 683565275, %v2098
  %v2100 = vshll.u32 683565275, %v2097
  %v2101 = vshrl.u32 2475754826, %v2098
  %v2102 = vor.u32 %v2100, %v2101
  %v2103 = vshll.u32 2475754826, %v2097
  %v2104 = vshrl.u32 2131351028, %v2098
  %v2105 = vor.u32 %v2103, %v2104
  %v2106 = vshll.u32 2131351028, %v2097
  %v2107 = vshrl.u32 2102212464, %v2098
  %v2108 = vor.u32 %v2106, %v2107
  %v2109 = vshll.u32 2102212464, %v2097
  %v2110 = vshrl.u32 920167782, %v2098
  %v2111 = vor.u32 %v2109, %v2110
  %v2112 = vshll.u32 920167782, %v2097
  %v2113 = vshrl.u32 1326507024, %v2098
  %v2114 = vor.u32 %v2112, %v2113
  %vm2115 = vcmp.lt.s32.totalorder %v2096, 1
  %vm2116 = vcmp.lt.s32.totalorder %v2096, 2
  %vm2117 = vcmp.lt.s32.totalorder %v2096, 3
  %vm2118 = vcmp.lt.s32.totalorder %v2096, 4
  %v2119 = vsel %vm2115, %v2099, %v2102
  %v2120 = vsel %vm2118, %v2108, 2102212464
  %v2121 = vsel %vm2117, %v2105, %v2120
  %v2122 = vsel %vm2116, %v2119, %v2121
  %v2123 = vsel %vm2115, %v2102, %v2105
  %v2124 = vsel %vm2118, %v2111, 920167782
  %v2125 = vsel %vm2117, %v2108, %v2124
  %v2126 = vsel %vm2116, %v2123, %v2125
  %v2127 = vsel %vm2115, %v2105, %v2108
  %v2128 = vsel %vm2118, %v2114, 1326507024
  %v2129 = vsel %vm2117, %v2111, %v2128
  %v2130 = vsel %vm2116, %v2127, %v2129
  %v2131 = vshll.u32 %v2091, 8
  %v2132 = vmul.u32.u64.compose %v2131, %v2130
  %v2133 = vextract.low.u32 %v2132
  %v2134 = vextract.high.u32 %v2132
  %v2135 = vmul.u32.u64.compose %v2131, %v2126
  %v2136 = vextract.low.u32 %v2135
  %v2137 = vextract.high.u32 %v2135
  %v2138 = vmul.u32 %v2131, %v2122
  %v2139 = vadd.s32 %v2134, %v2136
  %vm2140 = vc.u32 %v2134, %v2136
  %v2141 = vadd.s32 %v2137, 1
  %v2142 = vsel %vm2140, %v2141, %v2137
  %v2143 = vadd.s32 %v2138, %v2142
  %v2144 = vadd.s32 %v2143, 536870912
  %v2145 = vshrl.u32 %v2144, 30
  %v2146 = vshll.u32 %v2145, 30
  %v2147 = vsub.s32 %v2143, %v2146
  %vm2148 = vcmp.lt.s32.totalorder %v2147, 0
  %v2149 = vsub.s32 0, %v2147
  %v2150 = vsel %vm2148, %v2149, %v2147
  %v2151 = vclz %v2150
  %v2152 = vsub.s32 %v2151, 2
  %vm2153 = vcmp.gt.s32.totalorder 0, %v2152
  %v2154 = vsel %vm2153, 0, %v2152
  %v2155 = vsub.s32 32, %v2154
  %v2156 = vshll.u32 %v2147, %v2154
  %v2157 = vshrl.u32 %v2139, %v2155
  %v2158 = vor.u32 %v2156, %v2157
  %v2159 = vsub.s32 4294967266, %v2154
  %v2160 = vadd.s32 %v2159, 127
  %v2161 = vshll.u32 %v2160, 23
  %v2162 = vor.u32 4788187, %v2161
  %v2163 = vand.u32 2147483647, %v2162
  %v2165 = vcvt.s32.f32 %v2158
  %v2166 = vmul.f32 %v2165, %v2163
  %v2167 = vxor.u32 %v2166, 2147483648
  %v2168 = vsel %vm2085, %v2167, %v2166
  %v2169 = vsub.s32 4, %v2145
  %v2170 = vsel %vm2085, %v2169, %v2145
  %v2171 = vsel %vm2084, %v2082, %v2168
  %v2172 = vsel %vm2084, 0, %v2170
  %v2173 = vcosq.f32.pop %v2171
  %v2174 = vsinq.f32.pop %v2171
  %vm2175 = vweird.f32 %v2082
  %v2176 = vand.u32 %v2172, 3
  %vm2177 = vcmp.lt.s32.totalorder %v2176, 2
  %vm2178 = vcmp.eq.s32.totalorder %v2176, 0
  %v2179 = vxor.u32 %v2174, 2147483648
  %v2180 = vsel %vm2178, %v2173, %v2179
  %vm2181 = vcmp.eq.s32.totalorder %v2176, 2
  %v2182 = vxor.u32 %v2173, 2147483648
  %v2183 = vsel %vm2181, %v2182, %v2174
  %v2184 = vsel %vm2177, %v2180, %v2183
  %v2185 = vsel %vm2175, nan, %v2184
  %2187 = vrot.lane.b32.xlu0 %v2185, 29
  %v2188 = vpop.permute.xlu0 %2187
  %v2190 = vmul.f32 %v2002, %v2188
  %2192 = vrot.lane.b32.xlu0 %v2190, 97
  %v2193 = vpop.permute.xlu0 %2192
  %v2195 = vadd.f32 %v26, %v2193
  %v2196 = vand.u32 2147483647, %v2082
  %vm2197 = vcmp.le.f32.partialorder %v2196, 0.7853982
  %vm2198 = vcmp.lt.s32.totalorder %v2082, 0
  %v2199 = vand.u32 %v2082, 2139095040
  %v2200 = vshrl.u32 %v2199, 23
  %v2201 = vsub.s32 %v2200, 127
  %v2202 = vand.u32 2147483647, %v2082
  %v2203 = vand.u32 %v2202, 8388607
  %v2204 = vor.u32 %v2203, 8388608
  %v2205 = vsub.s32 0, %v2204
  %v2206 = vadd.s32 %v2201, 1
  %vm2207 = vcmp.gt.s32.totalorder %v2206, 0
  %v2208 = vsel %vm2207, %v2206, 0
  %v2209 = vshrl.u32 %v2208, 5
  %v2210 = vand.u32 %v2208, 31
  %v2211 = vsub.s32 32, %v2210
  %v2212 = vshrl.u32 683565275, %v2211
  %v2213 = vshll.u32 683565275, %v2210
  %v2214 = vshrl.u32 2475754826, %v2211
  %v2215 = vor.u32 %v2213, %v2214
  %v2216 = vshll.u32 2475754826, %v2210
  %v2217 = vshrl.u32 2131351028, %v2211
  %v2218 = vor.u32 %v2216, %v2217
  %v2219 = vshll.u32 2131351028, %v2210
  %v2220 = vshrl.u32 2102212464, %v2211
  %v2221 = vor.u32 %v2219, %v2220
  %v2222 = vshll.u32 2102212464, %v2210
  %v2223 = vshrl.u32 920167782, %v2211
  %v2224 = vor.u32 %v2222, %v2223
  %v2225 = vshll.u32 920167782, %v2210
  %v2226 = vshrl.u32 1326507024, %v2211
  %v2227 = vor.u32 %v2225, %v2226
  %vm2228 = vcmp.lt.s32.totalorder %v2209, 1
  %vm2229 = vcmp.lt.s32.totalorder %v2209, 2
  %vm2230 = vcmp.lt.s32.totalorder %v2209, 3
  %vm2231 = vcmp.lt.s32.totalorder %v2209, 4
  %v2232 = vsel %vm2228, %v2212, %v2215
  %v2233 = vsel %vm2231, %v2221, 2102212464
  %v2234 = vsel %vm2230, %v2218, %v2233
  %v2235 = vsel %vm2229, %v2232, %v2234
  %v2236 = vsel %vm2228, %v2215, %v2218
  %v2237 = vsel %vm2231, %v2224, 920167782
  %v2238 = vsel %vm2230, %v2221, %v2237
  %v2239 = vsel %vm2229, %v2236, %v2238
  %v2240 = vsel %vm2228, %v2218, %v2221
  %v2241 = vsel %vm2231, %v2227, 1326507024
  %v2242 = vsel %vm2230, %v2224, %v2241
  %v2243 = vsel %vm2229, %v2240, %v2242
  %v2244 = vshll.u32 %v2204, 8
  %v2245 = vmul.u32.u64.compose %v2244, %v2243
  %v2246 = vextract.low.u32 %v2245
  %v2247 = vextract.high.u32 %v2245
  %v2248 = vmul.u32.u64.compose %v2244, %v2239
  %v2249 = vextract.low.u32 %v2248
  %v2250 = vextract.high.u32 %v2248
  %v2251 = vmul.u32 %v2244, %v2235
  %v2252 = vadd.s32 %v2247, %v2249
  %vm2253 = vc.u32 %v2247, %v2249
  %v2254 = vadd.s32 %v2250, 1
  %v2255 = vsel %vm2253, %v2254, %v2250
  %v2256 = vadd.s32 %v2251, %v2255
  %v2257 = vadd.s32 %v2256, 536870912
  %v2258 = vshrl.u32 %v2257, 30
  %v2259 = vshll.u32 %v2258, 30
  %v2260 = vsub.s32 %v2256, %v2259
  %vm2261 = vcmp.lt.s32.totalorder %v2260, 0
  %v2262 = vsub.s32 0, %v2260
  %v2263 = vsel %vm2261, %v2262, %v2260
  %v2264 = vclz %v2263
  %v2265 = vsub.s32 %v2264, 2
  %vm2266 = vcmp.gt.s32.totalorder 0, %v2265
  %v2267 = vsel %vm2266, 0, %v2265
  %v2268 = vsub.s32 32, %v2267
  %v2269 = vshll.u32 %v2260, %v2267
  %v2270 = vshrl.u32 %v2252, %v2268
  %v2271 = vor.u32 %v2269, %v2270
  %v2272 = vsub.s32 4294967266, %v2267
  %v2273 = vadd.s32 %v2272, 127
  %v2274 = vshll.u32 %v2273, 23
  %v2275 = vor.u32 4788187, %v2274
  %v2276 = vand.u32 2147483647, %v2275
  %v2278 = vcvt.s32.f32 %v2271
  %v2279 = vmul.f32 %v2278, %v2276
  %v2280 = vxor.u32 %v2279, 2147483648
  %v2281 = vsel %vm2198, %v2280, %v2279
  %v2282 = vsub.s32 4, %v2258
  %v2283 = vsel %vm2198, %v2282, %v2258
  %v2284 = vsel %vm2197, %v2082, %v2281
  %v2285 = vsel %vm2197, 0, %v2283
  %v2286 = vcosq.f32.pop %v2284
  %v2287 = vsinq.f32.pop %v2284
  %vm2288 = vweird.f32 %v2082
  %v2289 = vadd.s32 %v2285, 3
  %v2290 = vand.u32 %v2289, 3
  %vm2291 = vcmp.lt.s32.totalorder %v2290, 2
  %vm2292 = vcmp.eq.s32.totalorder %v2290, 0
  %v2293 = vxor.u32 %v2287, 2147483648
  %v2294 = vsel %vm2292, %v2286, %v2293
  %vm2295 = vcmp.eq.s32.totalorder %v2290, 2
  %v2296 = vxor.u32 %v2286, 2147483648
  %v2297 = vsel %vm2295, %v2296, %v2287
  %v2298 = vsel %vm2291, %v2294, %v2297
  %v2299 = vsel %vm2288, nan, %v2298
  %2301 = vrot.lane.b32.xlu0 %v2299, 29
  %v2302 = vpop.permute.xlu0 %2301
  %v2304 = vmul.f32 %v2002, %v2302
  %2306 = vrot.lane.b32.xlu0 %v2304, 98
  %v2307 = vpop.permute.xlu0 %2306
  %v2309 = vadd.f32 %v26, %v2307
  %2310 = vst [vmem:[%s2] sm:$0x3] 0.0
  %vm2311 = vcmask 9216
  %2312 = vst.msk [vmem:[%s2] sm:$0x3] %vm2311, %v2072
  %2314 = vrot.lane.b32.xlu0 %v1983, 94
  %v2315 = vpop.permute.xlu0 %2314
  %vm2317 = vcmask 17424
  %2318 = vst.msk [vmem:[%s2] sm:$0x3] %vm2317, %v2315
  %2320 = vrot.lane.b32.xlu0 %v2005, 94
  %v2321 = vpop.permute.xlu0 %2320
  %vm2323 = vcmask 25624
  %2324 = vst.msk [vmem:[%s2] sm:$0x3] %vm2323, %v2321
  %2326 = vrot.lane.b32.xlu0 %v2195, 2
  %v2327 = vpop.permute.xlu0 %2326
  %vm2329 = vcmask 33824
  %2330 = vst.msk [vmem:[%s2] sm:$0x3] %vm2329, %v2327
  %2332 = vrot.lane.b32.xlu0 %v2309, 2
  %v2333 = vpop.permute.xlu0 %2332
  %vm2335 = vcmask 42024
  %2336 = vst.msk [vmem:[%s2] sm:$0x3] %vm2335, %v2333
  %2338 = vrot.lane.b32.xlu0 %v2082, 2
  %v2339 = vpop.permute.xlu0 %2338
  %vm2341 = vcmask 50224
  %2342 = vst.msk [vmem:[%s2] sm:$0x3] %vm2341, %v2339
  // Predicated region
  $region10: #{composite_forward.1} parent=0 // pred_check
    _
  $region11: #{composite_forward.1} parent=0 // pred_check_branch
    %2344 = sbr.rel (0) target = $region13
  $region12: #{composite_forward.1} parent=0 // pred_region
    _
  $region13: #{composite_forward.1} parent=0 // pred_fallthru
    _
  // Predicated region
  $region14: #{composite_forward.1} parent=0 // pred_check
    _
  $region15: #{composite_forward.1} parent=0 // pred_check_branch
    %2346 = sbr.rel (0) target = $region17
  $region16: #{composite_forward.1} parent=0 // pred_region
    _
  $region17: #{composite_forward.1} parent=0 // pred_fallthru
    _

</llo_original>
